<compile_context>
chip_gen: v6e
topology: v6e:2x2x1
jax: 0.10.0
libtpu: 0.0.40
codegen_flags: <defaults>
</compile_context>

<pallas_src>
import functools
import math

import jax
import jax.numpy as jnp
from jax.experimental import pallas as pl
from jax.experimental.pallas import tpu as pltpu


def _round_up(a, b):
    return (a + b - 1) // b * b


def _pick_rows(nh, W, C_in, C_out, target_pixel_rows):
    """Number of input image-rows processed per grid step (static Python int)."""
    rows = max(1, target_pixel_rows // W)
    rows = min(rows, nh, 128)  # bound the static unroll in the kernel
    # Keep double-buffered in/out blocks plus the f32 accumulator under ~10 MiB
    # (padded (8,128) layouts), well inside every generation's scoped VMEM.
    per_row = 4 * (
        W * _round_up(C_in, 128)                              # x block
        + _round_up(2 * W, 8) * _round_up(2 * C_out, 128)     # y block
        + W * _round_up(4 * C_out, 128))                      # accumulator
    rows = min(rows, max(1, (10 << 20) // (2 * per_row)))
    # Sublane alignment of the (rows*W, C_in) input block.
    step = 8 // math.gcd(W, 8)
    if rows % step != 0:
        rows = max(step, (rows // step) * step)
    if rows >= nh:
        rows = nh  # block covers the full extent: always a legal block shape
    return rows


def _upsample_kernel(x_ref, w_ref, b_ref, o_ref, *, rows, W, C_out):
    # x_ref: (rows*W, C_in)       pixels of `rows` input image-rows
    # w_ref: (C_in, 4*C_out)      columns ordered (di, dj, oc)
    # b_ref: (1, 4*C_out)
    # o_ref: (rows, 2*W, 2*C_out) where
    #        o[r, di*W + j, dj*C_out + oc] == y_nhwc[., 2*row+di, 2*j+dj, oc]
    acc = jnp.dot(x_ref[...], w_ref[...], preferred_element_type=jnp.float32)
    acc = (acc + b_ref[...]).astype(o_ref.dtype)       # (rows*W, 4*C_out)
    c2 = 2 * C_out
    for r in range(rows):                              # static unroll, VMEM only
        slab = acc[r * W:(r + 1) * W, :]               # (W, 4*C_out)
        o_ref[r, :W, :] = slab[:, :c2]                 # di = 0 -> output row 2r
        o_ref[r, W:, :] = slab[:, c2:]                 # di = 1 -> output row 2r+1


def upsample_nhwc(x_nhwc, weight, bias, *, target_pixel_rows=2048):
    """ConvTranspose2d(k=2, s=2) on channels-last input (the fast path).

    x_nhwc: (N, H, W, C_in); weight: (C_in, C_out, 2, 2) (PyTorch layout);
    bias: (C_out,).  Returns (N, 2H, 2W, C_out) channels-last.
    """
    N, H, W, C_in = x_nhwc.shape
    C_out = weight.shape[1]
    nh = N * H
    rows = _pick_rows(nh, W, C_in, C_out, target_pixel_rows)

    # Bit-preserving reshapes / tiny weight shuffles only -- no extra HBM
    # round trip on the big activation tensors.
    x_mat = x_nhwc.reshape(nh * W, C_in)
    w_mat = jnp.transpose(weight, (0, 2, 3, 1)).reshape(C_in, 4 * C_out)
    b_mat = jnp.tile(bias, 4).reshape(1, 4 * C_out)

    kernel = functools.partial(_upsample_kernel, rows=rows, W=W, C_out=C_out)
    M = nh * W
    cost = pl.CostEstimate(
        flops=2 * M * C_in * 4 * C_out,
        transcendentals=0,
        bytes_accessed=4 * (M * C_in + C_in * 4 * C_out + M * 4 * C_out),
    )

    out = pl.pallas_call(
        kernel,
        out_shape=jax.ShapeDtypeStruct((nh, 2 * W, 2 * C_out), x_nhwc.dtype),
        grid_spec=pltpu.PrefetchScalarGridSpec(
            num_scalar_prefetch=0,
            grid=(pl.cdiv(nh, rows),),
            in_specs=[
                pl.BlockSpec((rows * W, C_in), lambda i: (i, 0)),
                pl.BlockSpec((C_in, 4 * C_out), lambda i: (0, 0)),
                pl.BlockSpec((1, 4 * C_out), lambda i: (0, 0)),
            ],
            out_specs=pl.BlockSpec((rows, 2 * W, 2 * C_out),
                                   lambda i: (i, 0, 0)),
        ),
        compiler_params=pltpu.CompilerParams(
            dimension_semantics=("parallel",)),
        cost_estimate=cost,
    )(x_mat, w_mat, b_mat)

    # (N*H, 2W, 2*C_out) is already NHWC bytes: pure reshape, zero data movement.
    return out.reshape(N, 2 * H, 2 * W, C_out)


@functools.partial(jax.jit, static_argnames=("target_pixel_rows",))
def upsample_conv_transpose2d(x, weight, bias, *, target_pixel_rows=2048):
    """Drop-in NCHW interface matching the PyTorch UpSample module."""
    # Layout adapter only; use upsample_nhwc directly for channels-last data.
    x_nhwc = jnp.transpose(x, (0, 2, 3, 1))
    y_nhwc = upsample_nhwc(x_nhwc, weight, bias,
                           target_pixel_rows=target_pixel_rows)
    return jnp.transpose(y_nhwc, (0, 3, 1, 2))


if __name__ == "__main__":
    key = jax.random.PRNGKey(0)
    k_x, k_w, k_b = jax.random.split(key, 3)

    # Shapes implied by the module: UpSample(in_channels=4, out_channels=8).
    N, C_in, C_out, H, W = 2, 4, 8, 16, 16
    x = jax.random.normal(k_x, (N, C_in, H, W), dtype=jnp.float32)
    weight = jax.random.normal(k_w, (C_in, C_out, 2, 2), dtype=jnp.float32) * 0.1
    bias = jax.random.normal(k_b, (C_out,), dtype=jnp.float32) * 0.1

    out = jax.block_until_ready(upsample_conv_transpose2d(x, weight, bias))

    ref = jnp.einsum("nchw,copq->nohpwq", x, weight).reshape(
        N, C_out, 2 * H, 2 * W) + bias[None, :, None, None]
    assert out.shape == (N, C_out, 2 * H, 2 * W)
    assert jnp.allclose(out, ref, atol=1e-4, rtol=1e-4)

    # Second config: multi-step grid with a ragged last tile (pl.cdiv masking)
    # and odd channel counts, to exercise the non-divisible path.
    N2, C_in2, C_out2, H2, W2 = 1, 3, 4, 9, 16
    x2 = jax.random.normal(k_x, (N2, C_in2, H2, W2), dtype=jnp.float32)
    w2 = jax.random.normal(k_w, (C_in2, C_out2, 2, 2), dtype=jnp.float32) * 0.1
    b2 = jax.random.normal(k_b, (C_out2,), dtype=jnp.float32) * 0.1
    out2 = jax.block_until_ready(
        upsample_conv_transpose2d(x2, w2, b2, target_pixel_rows=64))
    ref2 = jnp.einsum("nchw,copq->nohpwq", x2, w2).reshape(
        N2, C_out2, 2 * H2, 2 * W2) + b2[None, :, None, None]
    assert out2.shape == (N2, C_out2, 2 * H2, 2 * W2)
    assert jnp.allclose(out2, ref2, atol=1e-4, rtol=1e-4)

    print("KERNEL_OK")
</pallas_src>

<mosaic_0001>
module attributes {stable_mosaic.version = 11 : i64} {
  func.func @_upsample_kernel(%arg0: i32, %arg1: memref<512x4xf32, #tpu.memory_space<vmem>>, %arg2: memref<4x32xf32, #tpu.memory_space<vmem>>, %arg3: memref<1x32xf32, #tpu.memory_space<vmem>>, %arg4: memref<32x32x16xf32, #tpu.memory_space<vmem>>) attributes {dimension_semantics = [#tpu.dimension_semantics<parallel>], iteration_bounds = array<i64: 1>, scalar_prefetch = 0 : i64, scratch_operands = 0 : i64, tpu.core_type = #tpu.core_type<tc>, window_params = [{transform_indices = @transform_0, window_bounds = array<i64: 512, 4>}, {pipeline_mode = #tpu.pipeline_mode<synchronous>, transform_indices = @transform_1, window_bounds = array<i64: 4, 32>}, {pipeline_mode = #tpu.pipeline_mode<synchronous>, transform_indices = @transform_2, window_bounds = array<i64: 1, 32>}, {transform_indices = @transform_3, window_bounds = array<i64: 32, 32, 16>}]} {
    %c0 = arith.constant 0 : index
    %c0_0 = arith.constant 0 : index
    %0 = vector.load %arg1[%c0, %c0_0] : memref<512x4xf32, #tpu.memory_space<vmem>>, vector<512x4xf32>
    %c0_1 = arith.constant 0 : index
    %c0_2 = arith.constant 0 : index
    %1 = vector.load %arg2[%c0_1, %c0_2] : memref<4x32xf32, #tpu.memory_space<vmem>>, vector<4x32xf32>
    %cst = arith.constant dense<0.000000e+00> : vector<512x32xf32>
    %2 = tpu.matmul %0, %1, %cst {dimension_numbers = #tpu.dot_dimension_numbers<[1], [0], [0], [1], [0, 0, 1, 1], [], []>} : vector<512x4xf32>, vector<4x32xf32>, vector<512x32xf32> -> vector<512x32xf32>
    %c0_3 = arith.constant 0 : index
    %c0_4 = arith.constant 0 : index
    %3 = vector.load %arg3[%c0_3, %c0_4] : memref<1x32xf32, #tpu.memory_space<vmem>>, vector<1x32xf32>
    %4 = vector.broadcast %3 : vector<1x32xf32> to vector<512x32xf32>
    %5 = arith.addf %2, %4 : vector<512x32xf32>
    %6 = vector.extract_strided_slice %5 {offsets = [0, 0], sizes = [16, 32], strides = [1, 1]} : vector<512x32xf32> to vector<16x32xf32>
    %7 = vector.extract_strided_slice %6 {offsets = [0, 0], sizes = [16, 16], strides = [1, 1]} : vector<16x32xf32> to vector<16x16xf32>
    %c0_5 = arith.constant 0 : index
    %c0_6 = arith.constant 0 : index
    %c0_7 = arith.constant 0 : index
    %8 = vector.load %arg4[%c0_5, %c0_6, %c0_7] : memref<32x32x16xf32, #tpu.memory_space<vmem>>, vector<1x16x16xf32>
    %9 = vector.shape_cast %8 : vector<1x16x16xf32> to vector<16x16xf32>
    %10 = vector.shape_cast %7 : vector<16x16xf32> to vector<1x16x16xf32>
    tpu.vector_store %arg4[%c0_5, %c0_6, %c0_7], %10 {strides = array<i32>} : memref<32x32x16xf32, #tpu.memory_space<vmem>>, vector<1x16x16xf32>,
    %11 = vector.extract_strided_slice %6 {offsets = [0, 16], sizes = [16, 16], strides = [1, 1]} : vector<16x32xf32> to vector<16x16xf32>
    %c0_8 = arith.constant 0 : index
    %c16 = arith.constant 16 : index
    %c0_9 = arith.constant 0 : index
    %12 = vector.load %arg4[%c0_8, %c16, %c0_9] : memref<32x32x16xf32, #tpu.memory_space<vmem>>, vector<1x16x16xf32>
    %13 = vector.shape_cast %12 : vector<1x16x16xf32> to vector<16x16xf32>
    %14 = vector.shape_cast %11 : vector<16x16xf32> to vector<1x16x16xf32>
    tpu.vector_store %arg4[%c0_8, %c16, %c0_9], %14 {strides = array<i32>} : memref<32x32x16xf32, #tpu.memory_space<vmem>>, vector<1x16x16xf32>,
    %15 = vector.extract_strided_slice %5 {offsets = [16, 0], sizes = [16, 32], strides = [1, 1]} : vector<512x32xf32> to vector<16x32xf32>
    %16 = vector.extract_strided_slice %15 {offsets = [0, 0], sizes = [16, 16], strides = [1, 1]} : vector<16x32xf32> to vector<16x16xf32>
    %c1 = arith.constant 1 : index
    %c0_10 = arith.constant 0 : index
    %c0_11 = arith.constant 0 : index
    %17 = vector.load %arg4[%c1, %c0_10, %c0_11] : memref<32x32x16xf32, #tpu.memory_space<vmem>>, vector<1x16x16xf32>
    %18 = vector.shape_cast %17 : vector<1x16x16xf32> to vector<16x16xf32>
    %19 = vector.shape_cast %16 : vector<16x16xf32> to vector<1x16x16xf32>
    tpu.vector_store %arg4[%c1, %c0_10, %c0_11], %19 {strides = array<i32>} : memref<32x32x16xf32, #tpu.memory_space<vmem>>, vector<1x16x16xf32>,
    %20 = vector.extract_strided_slice %15 {offsets = [0, 16], sizes = [16, 16], strides = [1, 1]} : vector<16x32xf32> to vector<16x16xf32>
    %c1_12 = arith.constant 1 : index
    %c16_13 = arith.constant 16 : index
    %c0_14 = arith.constant 0 : index
    %21 = vector.load %arg4[%c1_12, %c16_13, %c0_14] : memref<32x32x16xf32, #tpu.memory_space<vmem>>, vector<1x16x16xf32>
    %22 = vector.shape_cast %21 : vector<1x16x16xf32> to vector<16x16xf32>
    %23 = vector.shape_cast %20 : vector<16x16xf32> to vector<1x16x16xf32>
    tpu.vector_store %arg4[%c1_12, %c16_13, %c0_14], %23 {strides = array<i32>} : memref<32x32x16xf32, #tpu.memory_space<vmem>>, vector<1x16x16xf32>,
    %24 = vector.extract_strided_slice %5 {offsets = [32, 0], sizes = [16, 32], strides = [1, 1]} : vector<512x32xf32> to vector<16x32xf32>
    %25 = vector.extract_strided_slice %24 {offsets = [0, 0], sizes = [16, 16], strides = [1, 1]} : vector<16x32xf32> to vector<16x16xf32>
    %c2 = arith.constant 2 : index
    %c0_15 = arith.constant 0 : index
    %c0_16 = arith.constant 0 : index
    %26 = vector.load %arg4[%c2, %c0_15, %c0_16] : memref<32x32x16xf32, #tpu.memory_space<vmem>>, vector<1x16x16xf32>
    %27 = vector.shape_cast %26 : vector<1x16x16xf32> to vector<16x16xf32>
    %28 = vector.shape_cast %25 : vector<16x16xf32> to vector<1x16x16xf32>
    tpu.vector_store %arg4[%c2, %c0_15, %c0_16], %28 {strides = array<i32>} : memref<32x32x16xf32, #tpu.memory_space<vmem>>, vector<1x16x16xf32>,
    %29 = vector.extract_strided_slice %24 {offsets = [0, 16], sizes = [16, 16], strides = [1, 1]} : vector<16x32xf32> to vector<16x16xf32>
    %c2_17 = arith.constant 2 : index
    %c16_18 = arith.constant 16 : index
    %c0_19 = arith.constant 0 : index
    %30 = vector.load %arg4[%c2_17, %c16_18, %c0_19] : memref<32x32x16xf32, #tpu.memory_space<vmem>>, vector<1x16x16xf32>
    %31 = vector.shape_cast %30 : vector<1x16x16xf32> to vector<16x16xf32>
    %32 = vector.shape_cast %29 : vector<16x16xf32> to vector<1x16x16xf32>
    tpu.vector_store %arg4[%c2_17, %c16_18, %c0_19], %32 {strides = array<i32>} : memref<32x32x16xf32, #tpu.memory_space<vmem>>, vector<1x16x16xf32>,
    %33 = vector.extract_strided_slice %5 {offsets = [48, 0], sizes = [16, 32], strides = [1, 1]} : vector<512x32xf32> to vector<16x32xf32>
    %34 = vector.extract_strided_slice %33 {offsets = [0, 0], sizes = [16, 16], strides = [1, 1]} : vector<16x32xf32> to vector<16x16xf32>
    %c3 = arith.constant 3 : index
    %c0_20 = arith.constant 0 : index
    %c0_21 = arith.constant 0 : index
    %35 = vector.load %arg4[%c3, %c0_20, %c0_21] : memref<32x32x16xf32, #tpu.memory_space<vmem>>, vector<1x16x16xf32>
    %36 = vector.shape_cast %35 : vector<1x16x16xf32> to vector<16x16xf32>
    %37 = vector.shape_cast %34 : vector<16x16xf32> to vector<1x16x16xf32>
    tpu.vector_store %arg4[%c3, %c0_20, %c0_21], %37 {strides = array<i32>} : memref<32x32x16xf32, #tpu.memory_space<vmem>>, vector<1x16x16xf32>,
    %38 = vector.extract_strided_slice %33 {offsets = [0, 16], sizes = [16, 16], strides = [1, 1]} : vector<16x32xf32> to vector<16x16xf32>
    %c3_22 = arith.constant 3 : index
    %c16_23 = arith.constant 16 : index
    %c0_24 = arith.constant 0 : index
    %39 = vector.load %arg4[%c3_22, %c16_23, %c0_24] : memref<32x32x16xf32, #tpu.memory_space<vmem>>, vector<1x16x16xf32>
    %40 = vector.shape_cast %39 : vector<1x16x16xf32> to vector<16x16xf32>
    %41 = vector.shape_cast %38 : vector<16x16xf32> to vector<1x16x16xf32>
    tpu.vector_store %arg4[%c3_22, %c16_23, %c0_24], %41 {strides = array<i32>} : memref<32x32x16xf32, #tpu.memory_space<vmem>>, vector<1x16x16xf32>,
    %42 = vector.extract_strided_slice %5 {offsets = [64, 0], sizes = [16, 32], strides = [1, 1]} : vector<512x32xf32> to vector<16x32xf32>
    %43 = vector.extract_strided_slice %42 {offsets = [0, 0], sizes = [16, 16], strides = [1, 1]} : vector<16x32xf32> to vector<16x16xf32>
    %c4 = arith.constant 4 : index
    %c0_25 = arith.constant 0 : index
    %c0_26 = arith.constant 0 : index
    %44 = vector.load %arg4[%c4, %c0_25, %c0_26] : memref<32x32x16xf32, #tpu.memory_space<vmem>>, vector<1x16x16xf32>
    %45 = vector.shape_cast %44 : vector<1x16x16xf32> to vector<16x16xf32>
    %46 = vector.shape_cast %43 : vector<16x16xf32> to vector<1x16x16xf32>
    tpu.vector_store %arg4[%c4, %c0_25, %c0_26], %46 {strides = array<i32>} : memref<32x32x16xf32, #tpu.memory_space<vmem>>, vector<1x16x16xf32>,
    %47 = vector.extract_strided_slice %42 {offsets = [0, 16], sizes = [16, 16], strides = [1, 1]} : vector<16x32xf32> to vector<16x16xf32>
    %c4_27 = arith.constant 4 : index
    %c16_28 = arith.constant 16 : index
    %c0_29 = arith.constant 0 : index
    %48 = vector.load %arg4[%c4_27, %c16_28, %c0_29] : memref<32x32x16xf32, #tpu.memory_space<vmem>>, vector<1x16x16xf32>
    %49 = vector.shape_cast %48 : vector<1x16x16xf32> to vector<16x16xf32>
    %50 = vector.shape_cast %47 : vector<16x16xf32> to vector<1x16x16xf32>
    tpu.vector_store %arg4[%c4_27, %c16_28, %c0_29], %50 {strides = array<i32>} : memref<32x32x16xf32, #tpu.memory_space<vmem>>, vector<1x16x16xf32>,
    %51 = vector.extract_strided_slice %5 {offsets = [80, 0], sizes = [16, 32], strides = [1, 1]} : vector<512x32xf32> to vector<16x32xf32>
    %52 = vector.extract_strided_slice %51 {offsets = [0, 0], sizes = [16, 16], strides = [1, 1]} : vector<16x32xf32> to vector<16x16xf32>
    %c5 = arith.constant 5 : index
    %c0_30 = arith.constant 0 : index
    %c0_31 = arith.constant 0 : index
    %53 = vector.load %arg4[%c5, %c0_30, %c0_31] : memref<32x32x16xf32, #tpu.memory_space<vmem>>, vector<1x16x16xf32>
    %54 = vector.shape_cast %53 : vector<1x16x16xf32> to vector<16x16xf32>
    %55 = vector.shape_cast %52 : vector<16x16xf32> to vector<1x16x16xf32>
    tpu.vector_store %arg4[%c5, %c0_30, %c0_31], %55 {strides = array<i32>} : memref<32x32x16xf32, #tpu.memory_space<vmem>>, vector<1x16x16xf32>,
    %56 = vector.extract_strided_slice %51 {offsets = [0, 16], sizes = [16, 16], strides = [1, 1]} : vector<16x32xf32> to vector<16x16xf32>
    %c5_32 = arith.constant 5 : index
    %c16_33 = arith.constant 16 : index
    %c0_34 = arith.constant 0 : index
    %57 = vector.load %arg4[%c5_32, %c16_33, %c0_34] : memref<32x32x16xf32, #tpu.memory_space<vmem>>, vector<1x16x16xf32>
    %58 = vector.shape_cast %57 : vector<1x16x16xf32> to vector<16x16xf32>
    %59 = vector.shape_cast %56 : vector<16x16xf32> to vector<1x16x16xf32>
    tpu.vector_store %arg4[%c5_32, %c16_33, %c0_34], %59 {strides = array<i32>} : memref<32x32x16xf32, #tpu.memory_space<vmem>>, vector<1x16x16xf32>,
    %60 = vector.extract_strided_slice %5 {offsets = [96, 0], sizes = [16, 32], strides = [1, 1]} : vector<512x32xf32> to vector<16x32xf32>
    %61 = vector.extract_strided_slice %60 {offsets = [0, 0], sizes = [16, 16], strides = [1, 1]} : vector<16x32xf32> to vector<16x16xf32>
    %c6 = arith.constant 6 : index
    %c0_35 = arith.constant 0 : index
    %c0_36 = arith.constant 0 : index
    %62 = vector.load %arg4[%c6, %c0_35, %c0_36] : memref<32x32x16xf32, #tpu.memory_space<vmem>>, vector<1x16x16xf32>
    %63 = vector.shape_cast %62 : vector<1x16x16xf32> to vector<16x16xf32>
    %64 = vector.shape_cast %61 : vector<16x16xf32> to vector<1x16x16xf32>
    tpu.vector_store %arg4[%c6, %c0_35, %c0_36], %64 {strides = array<i32>} : memref<32x32x16xf32, #tpu.memory_space<vmem>>, vector<1x16x16xf32>,
    %65 = vector.extract_strided_slice %60 {offsets = [0, 16], sizes = [16, 16], strides = [1, 1]} : vector<16x32xf32> to vector<16x16xf32>
    %c6_37 = arith.constant 6 : index
    %c16_38 = arith.constant 16 : index
    %c0_39 = arith.constant 0 : index
    %66 = vector.load %arg4[%c6_37, %c16_38, %c0_39] : memref<32x32x16xf32, #tpu.memory_space<vmem>>, vector<1x16x16xf32>
    %67 = vector.shape_cast %66 : vector<1x16x16xf32> to vector<16x16xf32>
    %68 = vector.shape_cast %65 : vector<16x16xf32> to vector<1x16x16xf32>
    tpu.vector_store %arg4[%c6_37, %c16_38, %c0_39], %68 {strides = array<i32>} : memref<32x32x16xf32, #tpu.memory_space<vmem>>, vector<1x16x16xf32>,
    %69 = vector.extract_strided_slice %5 {offsets = [112, 0], sizes = [16, 32], strides = [1, 1]} : vector<512x32xf32> to vector<16x32xf32>
    %70 = vector.extract_strided_slice %69 {offsets = [0, 0], sizes = [16, 16], strides = [1, 1]} : vector<16x32xf32> to vector<16x16xf32>
    %c7 = arith.constant 7 : index
    %c0_40 = arith.constant 0 : index
    %c0_41 = arith.constant 0 : index
    %71 = vector.load %arg4[%c7, %c0_40, %c0_41] : memref<32x32x16xf32, #tpu.memory_space<vmem>>, vector<1x16x16xf32>
    %72 = vector.shape_cast %71 : vector<1x16x16xf32> to vector<16x16xf32>
    %73 = vector.shape_cast %70 : vector<16x16xf32> to vector<1x16x16xf32>
    tpu.vector_store %arg4[%c7, %c0_40, %c0_41], %73 {strides = array<i32>} : memref<32x32x16xf32, #tpu.memory_space<vmem>>, vector<1x16x16xf32>,
    %74 = vector.extract_strided_slice %69 {offsets = [0, 16], sizes = [16, 16], strides = [1, 1]} : vector<16x32xf32> to vector<16x16xf32>
    %c7_42 = arith.constant 7 : index
    %c16_43 = arith.constant 16 : index
    %c0_44 = arith.constant 0 : index
    %75 = vector.load %arg4[%c7_42, %c16_43, %c0_44] : memref<32x32x16xf32, #tpu.memory_space<vmem>>, vector<1x16x16xf32>
    %76 = vector.shape_cast %75 : vector<1x16x16xf32> to vector<16x16xf32>
    %77 = vector.shape_cast %74 : vector<16x16xf32> to vector<1x16x16xf32>
    tpu.vector_store %arg4[%c7_42, %c16_43, %c0_44], %77 {strides = array<i32>} : memref<32x32x16xf32, #tpu.memory_space<vmem>>, vector<1x16x16xf32>,
    %78 = vector.extract_strided_slice %5 {offsets = [128, 0], sizes = [16, 32], strides = [1, 1]} : vector<512x32xf32> to vector<16x32xf32>
    %79 = vector.extract_strided_slice %78 {offsets = [0, 0], sizes = [16, 16], strides = [1, 1]} : vector<16x32xf32> to vector<16x16xf32>
    %c8 = arith.constant 8 : index
    %c0_45 = arith.constant 0 : index
    %c0_46 = arith.constant 0 : index
    %80 = vector.load %arg4[%c8, %c0_45, %c0_46] : memref<32x32x16xf32, #tpu.memory_space<vmem>>, vector<1x16x16xf32>
    %81 = vector.shape_cast %80 : vector<1x16x16xf32> to vector<16x16xf32>
    %82 = vector.shape_cast %79 : vector<16x16xf32> to vector<1x16x16xf32>
    tpu.vector_store %arg4[%c8, %c0_45, %c0_46], %82 {strides = array<i32>} : memref<32x32x16xf32, #tpu.memory_space<vmem>>, vector<1x16x16xf32>,
    %83 = vector.extract_strided_slice %78 {offsets = [0, 16], sizes = [16, 16], strides = [1, 1]} : vector<16x32xf32> to vector<16x16xf32>
    %c8_47 = arith.constant 8 : index
    %c16_48 = arith.constant 16 : index
    %c0_49 = arith.constant 0 : index
    %84 = vector.load %arg4[%c8_47, %c16_48, %c0_49] : memref<32x32x16xf32, #tpu.memory_space<vmem>>, vector<1x16x16xf32>
    %85 = vector.shape_cast %84 : vector<1x16x16xf32> to vector<16x16xf32>
    %86 = vector.shape_cast %83 : vector<16x16xf32> to vector<1x16x16xf32>
    tpu.vector_store %arg4[%c8_47, %c16_48, %c0_49], %86 {strides = array<i32>} : memref<32x32x16xf32, #tpu.memory_space<vmem>>, vector<1x16x16xf32>,
    %87 = vector.extract_strided_slice %5 {offsets = [144, 0], sizes = [16, 32], strides = [1, 1]} : vector<512x32xf32> to vector<16x32xf32>
    %88 = vector.extract_strided_slice %87 {offsets = [0, 0], sizes = [16, 16], strides = [1, 1]} : vector<16x32xf32> to vector<16x16xf32>
    %c9 = arith.constant 9 : index
    %c0_50 = arith.constant 0 : index
    %c0_51 = arith.constant 0 : index
    %89 = vector.load %arg4[%c9, %c0_50, %c0_51] : memref<32x32x16xf32, #tpu.memory_space<vmem>>, vector<1x16x16xf32>
    %90 = vector.shape_cast %89 : vector<1x16x16xf32> to vector<16x16xf32>
    %91 = vector.shape_cast %88 : vector<16x16xf32> to vector<1x16x16xf32>
    tpu.vector_store %arg4[%c9, %c0_50, %c0_51], %91 {strides = array<i32>} : memref<32x32x16xf32, #tpu.memory_space<vmem>>, vector<1x16x16xf32>,
    %92 = vector.extract_strided_slice %87 {offsets = [0, 16], sizes = [16, 16], strides = [1, 1]} : vector<16x32xf32> to vector<16x16xf32>
    %c9_52 = arith.constant 9 : index
    %c16_53 = arith.constant 16 : index
    %c0_54 = arith.constant 0 : index
    %93 = vector.load %arg4[%c9_52, %c16_53, %c0_54] : memref<32x32x16xf32, #tpu.memory_space<vmem>>, vector<1x16x16xf32>
    %94 = vector.shape_cast %93 : vector<1x16x16xf32> to vector<16x16xf32>
    %95 = vector.shape_cast %92 : vector<16x16xf32> to vector<1x16x16xf32>
    tpu.vector_store %arg4[%c9_52, %c16_53, %c0_54], %95 {strides = array<i32>} : memref<32x32x16xf32, #tpu.memory_space<vmem>>, vector<1x16x16xf32>,
    %96 = vector.extract_strided_slice %5 {offsets = [160, 0], sizes = [16, 32], strides = [1, 1]} : vector<512x32xf32> to vector<16x32xf32>
    %97 = vector.extract_strided_slice %96 {offsets = [0, 0], sizes = [16, 16], strides = [1, 1]} : vector<16x32xf32> to vector<16x16xf32>
    %c10 = arith.constant 10 : index
    %c0_55 = arith.constant 0 : index
    %c0_56 = arith.constant 0 : index
    %98 = vector.load %arg4[%c10, %c0_55, %c0_56] : memref<32x32x16xf32, #tpu.memory_space<vmem>>, vector<1x16x16xf32>
    %99 = vector.shape_cast %98 : vector<1x16x16xf32> to vector<16x16xf32>
    %100 = vector.shape_cast %97 : vector<16x16xf32> to vector<1x16x16xf32>
    tpu.vector_store %arg4[%c10, %c0_55, %c0_56], %100 {strides = array<i32>} : memref<32x32x16xf32, #tpu.memory_space<vmem>>, vector<1x16x16xf32>,
    %101 = vector.extract_strided_slice %96 {offsets = [0, 16], sizes = [16, 16], strides = [1, 1]} : vector<16x32xf32> to vector<16x16xf32>
    %c10_57 = arith.constant 10 : index
    %c16_58 = arith.constant 16 : index
    %c0_59 = arith.constant 0 : index
    %102 = vector.load %arg4[%c10_57, %c16_58, %c0_59] : memref<32x32x16xf32, #tpu.memory_space<vmem>>, vector<1x16x16xf32>
    %103 = vector.shape_cast %102 : vector<1x16x16xf32> to vector<16x16xf32>
    %104 = vector.shape_cast %101 : vector<16x16xf32> to vector<1x16x16xf32>
    tpu.vector_store %arg4[%c10_57, %c16_58, %c0_59], %104 {strides = array<i32>} : memref<32x32x16xf32, #tpu.memory_space<vmem>>, vector<1x16x16xf32>,
    %105 = vector.extract_strided_slice %5 {offsets = [176, 0], sizes = [16, 32], strides = [1, 1]} : vector<512x32xf32> to vector<16x32xf32>
    %106 = vector.extract_strided_slice %105 {offsets = [0, 0], sizes = [16, 16], strides = [1, 1]} : vector<16x32xf32> to vector<16x16xf32>
    %c11 = arith.constant 11 : index
    %c0_60 = arith.constant 0 : index
    %c0_61 = arith.constant 0 : index
    %107 = vector.load %arg4[%c11, %c0_60, %c0_61] : memref<32x32x16xf32, #tpu.memory_space<vmem>>, vector<1x16x16xf32>
    %108 = vector.shape_cast %107 : vector<1x16x16xf32> to vector<16x16xf32>
    %109 = vector.shape_cast %106 : vector<16x16xf32> to vector<1x16x16xf32>
    tpu.vector_store %arg4[%c11, %c0_60, %c0_61], %109 {strides = array<i32>} : memref<32x32x16xf32, #tpu.memory_space<vmem>>, vector<1x16x16xf32>,
    %110 = vector.extract_strided_slice %105 {offsets = [0, 16], sizes = [16, 16], strides = [1, 1]} : vector<16x32xf32> to vector<16x16xf32>
    %c11_62 = arith.constant 11 : index
    %c16_63 = arith.constant 16 : index
    %c0_64 = arith.constant 0 : index
    %111 = vector.load %arg4[%c11_62, %c16_63, %c0_64] : memref<32x32x16xf32, #tpu.memory_space<vmem>>, vector<1x16x16xf32>
    %112 = vector.shape_cast %111 : vector<1x16x16xf32> to vector<16x16xf32>
    %113 = vector.shape_cast %110 : vector<16x16xf32> to vector<1x16x16xf32>
    tpu.vector_store %arg4[%c11_62, %c16_63, %c0_64], %113 {strides = array<i32>} : memref<32x32x16xf32, #tpu.memory_space<vmem>>, vector<1x16x16xf32>,
    %114 = vector.extract_strided_slice %5 {offsets = [192, 0], sizes = [16, 32], strides = [1, 1]} : vector<512x32xf32> to vector<16x32xf32>
    %115 = vector.extract_strided_slice %114 {offsets = [0, 0], sizes = [16, 16], strides = [1, 1]} : vector<16x32xf32> to vector<16x16xf32>
    %c12 = arith.constant 12 : index
    %c0_65 = arith.constant 0 : index
    %c0_66 = arith.constant 0 : index
    %116 = vector.load %arg4[%c12, %c0_65, %c0_66] : memref<32x32x16xf32, #tpu.memory_space<vmem>>, vector<1x16x16xf32>
    %117 = vector.shape_cast %116 : vector<1x16x16xf32> to vector<16x16xf32>
    %118 = vector.shape_cast %115 : vector<16x16xf32> to vector<1x16x16xf32>
    tpu.vector_store %arg4[%c12, %c0_65, %c0_66], %118 {strides = array<i32>} : memref<32x32x16xf32, #tpu.memory_space<vmem>>, vector<1x16x16xf32>,
    %119 = vector.extract_strided_slice %114 {offsets = [0, 16], sizes = [16, 16], strides = [1, 1]} : vector<16x32xf32> to vector<16x16xf32>
    %c12_67 = arith.constant 12 : index
    %c16_68 = arith.constant 16 : index
    %c0_69 = arith.constant 0 : index
    %120 = vector.load %arg4[%c12_67, %c16_68, %c0_69] : memref<32x32x16xf32, #tpu.memory_space<vmem>>, vector<1x16x16xf32>
    %121 = vector.shape_cast %120 : vector<1x16x16xf32> to vector<16x16xf32>
    %122 = vector.shape_cast %119 : vector<16x16xf32> to vector<1x16x16xf32>
    tpu.vector_store %arg4[%c12_67, %c16_68, %c0_69], %122 {strides = array<i32>} : memref<32x32x16xf32, #tpu.memory_space<vmem>>, vector<1x16x16xf32>,
    %123 = vector.extract_strided_slice %5 {offsets = [208, 0], sizes = [16, 32], strides = [1, 1]} : vector<512x32xf32> to vector<16x32xf32>
    %124 = vector.extract_strided_slice %123 {offsets = [0, 0], sizes = [16, 16], strides = [1, 1]} : vector<16x32xf32> to vector<16x16xf32>
    %c13 = arith.constant 13 : index
    %c0_70 = arith.constant 0 : index
    %c0_71 = arith.constant 0 : index
    %125 = vector.load %arg4[%c13, %c0_70, %c0_71] : memref<32x32x16xf32, #tpu.memory_space<vmem>>, vector<1x16x16xf32>
    %126 = vector.shape_cast %125 : vector<1x16x16xf32> to vector<16x16xf32>
    %127 = vector.shape_cast %124 : vector<16x16xf32> to vector<1x16x16xf32>
    tpu.vector_store %arg4[%c13, %c0_70, %c0_71], %127 {strides = array<i32>} : memref<32x32x16xf32, #tpu.memory_space<vmem>>, vector<1x16x16xf32>,
    %128 = vector.extract_strided_slice %123 {offsets = [0, 16], sizes = [16, 16], strides = [1, 1]} : vector<16x32xf32> to vector<16x16xf32>
    %c13_72 = arith.constant 13 : index
    %c16_73 = arith.constant 16 : index
    %c0_74 = arith.constant 0 : index
    %129 = vector.load %arg4[%c13_72, %c16_73, %c0_74] : memref<32x32x16xf32, #tpu.memory_space<vmem>>, vector<1x16x16xf32>
    %130 = vector.shape_cast %129 : vector<1x16x16xf32> to vector<16x16xf32>
    %131 = vector.shape_cast %128 : vector<16x16xf32> to vector<1x16x16xf32>
    tpu.vector_store %arg4[%c13_72, %c16_73, %c0_74], %131 {strides = array<i32>} : memref<32x32x16xf32, #tpu.memory_space<vmem>>, vector<1x16x16xf32>,
    %132 = vector.extract_strided_slice %5 {offsets = [224, 0], sizes = [16, 32], strides = [1, 1]} : vector<512x32xf32> to vector<16x32xf32>
    %133 = vector.extract_strided_slice %132 {offsets = [0, 0], sizes = [16, 16], strides = [1, 1]} : vector<16x32xf32> to vector<16x16xf32>
    %c14 = arith.constant 14 : index
    %c0_75 = arith.constant 0 : index
    %c0_76 = arith.constant 0 : index
    %134 = vector.load %arg4[%c14, %c0_75, %c0_76] : memref<32x32x16xf32, #tpu.memory_space<vmem>>, vector<1x16x16xf32>
    %135 = vector.shape_cast %134 : vector<1x16x16xf32> to vector<16x16xf32>
    %136 = vector.shape_cast %133 : vector<16x16xf32> to vector<1x16x16xf32>
    tpu.vector_store %arg4[%c14, %c0_75, %c0_76], %136 {strides = array<i32>} : memref<32x32x16xf32, #tpu.memory_space<vmem>>, vector<1x16x16xf32>,
    %137 = vector.extract_strided_slice %132 {offsets = [0, 16], sizes = [16, 16], strides = [1, 1]} : vector<16x32xf32> to vector<16x16xf32>
    %c14_77 = arith.constant 14 : index
    %c16_78 = arith.constant 16 : index
    %c0_79 = arith.constant 0 : index
    %138 = vector.load %arg4[%c14_77, %c16_78, %c0_79] : memref<32x32x16xf32, #tpu.memory_space<vmem>>, vector<1x16x16xf32>
    %139 = vector.shape_cast %138 : vector<1x16x16xf32> to vector<16x16xf32>
    %140 = vector.shape_cast %137 : vector<16x16xf32> to vector<1x16x16xf32>
    tpu.vector_store %arg4[%c14_77, %c16_78, %c0_79], %140 {strides = array<i32>} : memref<32x32x16xf32, #tpu.memory_space<vmem>>, vector<1x16x16xf32>,
    %141 = vector.extract_strided_slice %5 {offsets = [240, 0], sizes = [16, 32], strides = [1, 1]} : vector<512x32xf32> to vector<16x32xf32>
    %142 = vector.extract_strided_slice %141 {offsets = [0, 0], sizes = [16, 16], strides = [1, 1]} : vector<16x32xf32> to vector<16x16xf32>
    %c15 = arith.constant 15 : index
    %c0_80 = arith.constant 0 : index
    %c0_81 = arith.constant 0 : index
    %143 = vector.load %arg4[%c15, %c0_80, %c0_81] : memref<32x32x16xf32, #tpu.memory_space<vmem>>, vector<1x16x16xf32>
    %144 = vector.shape_cast %143 : vector<1x16x16xf32> to vector<16x16xf32>
    %145 = vector.shape_cast %142 : vector<16x16xf32> to vector<1x16x16xf32>
    tpu.vector_store %arg4[%c15, %c0_80, %c0_81], %145 {strides = array<i32>} : memref<32x32x16xf32, #tpu.memory_space<vmem>>, vector<1x16x16xf32>,
    %146 = vector.extract_strided_slice %141 {offsets = [0, 16], sizes = [16, 16], strides = [1, 1]} : vector<16x32xf32> to vector<16x16xf32>
    %c15_82 = arith.constant 15 : index
    %c16_83 = arith.constant 16 : index
    %c0_84 = arith.constant 0 : index
    %147 = vector.load %arg4[%c15_82, %c16_83, %c0_84] : memref<32x32x16xf32, #tpu.memory_space<vmem>>, vector<1x16x16xf32>
    %148 = vector.shape_cast %147 : vector<1x16x16xf32> to vector<16x16xf32>
    %149 = vector.shape_cast %146 : vector<16x16xf32> to vector<1x16x16xf32>
    tpu.vector_store %arg4[%c15_82, %c16_83, %c0_84], %149 {strides = array<i32>} : memref<32x32x16xf32, #tpu.memory_space<vmem>>, vector<1x16x16xf32>,
    %150 = vector.extract_strided_slice %5 {offsets = [256, 0], sizes = [16, 32], strides = [1, 1]} : vector<512x32xf32> to vector<16x32xf32>
    %151 = vector.extract_strided_slice %150 {offsets = [0, 0], sizes = [16, 16], strides = [1, 1]} : vector<16x32xf32> to vector<16x16xf32>
    %c16_85 = arith.constant 16 : index
    %c0_86 = arith.constant 0 : index
    %c0_87 = arith.constant 0 : index
    %152 = vector.load %arg4[%c16_85, %c0_86, %c0_87] : memref<32x32x16xf32, #tpu.memory_space<vmem>>, vector<1x16x16xf32>
    %153 = vector.shape_cast %152 : vector<1x16x16xf32> to vector<16x16xf32>
    %154 = vector.shape_cast %151 : vector<16x16xf32> to vector<1x16x16xf32>
    tpu.vector_store %arg4[%c16_85, %c0_86, %c0_87], %154 {strides = array<i32>} : memref<32x32x16xf32, #tpu.memory_space<vmem>>, vector<1x16x16xf32>,
    %155 = vector.extract_strided_slice %150 {offsets = [0, 16], sizes = [16, 16], strides = [1, 1]} : vector<16x32xf32> to vector<16x16xf32>
    %c16_88 = arith.constant 16 : index
    %c16_89 = arith.constant 16 : index
    %c0_90 = arith.constant 0 : index
    %156 = vector.load %arg4[%c16_88, %c16_89, %c0_90] : memref<32x32x16xf32, #tpu.memory_space<vmem>>, vector<1x16x16xf32>
    %157 = vector.shape_cast %156 : vector<1x16x16xf32> to vector<16x16xf32>
    %158 = vector.shape_cast %155 : vector<16x16xf32> to vector<1x16x16xf32>
    tpu.vector_store %arg4[%c16_88, %c16_89, %c0_90], %158 {strides = array<i32>} : memref<32x32x16xf32, #tpu.memory_space<vmem>>, vector<1x16x16xf32>,
    %159 = vector.extract_strided_slice %5 {offsets = [272, 0], sizes = [16, 32], strides = [1, 1]} : vector<512x32xf32> to vector<16x32xf32>
    %160 = vector.extract_strided_slice %159 {offsets = [0, 0], sizes = [16, 16], strides = [1, 1]} : vector<16x32xf32> to vector<16x16xf32>
    %c17 = arith.constant 17 : index
    %c0_91 = arith.constant 0 : index
    %c0_92 = arith.constant 0 : index
    %161 = vector.load %arg4[%c17, %c0_91, %c0_92] : memref<32x32x16xf32, #tpu.memory_space<vmem>>, vector<1x16x16xf32>
    %162 = vector.shape_cast %161 : vector<1x16x16xf32> to vector<16x16xf32>
    %163 = vector.shape_cast %160 : vector<16x16xf32> to vector<1x16x16xf32>
    tpu.vector_store %arg4[%c17, %c0_91, %c0_92], %163 {strides = array<i32>} : memref<32x32x16xf32, #tpu.memory_space<vmem>>, vector<1x16x16xf32>,
    %164 = vector.extract_strided_slice %159 {offsets = [0, 16], sizes = [16, 16], strides = [1, 1]} : vector<16x32xf32> to vector<16x16xf32>
    %c17_93 = arith.constant 17 : index
    %c16_94 = arith.constant 16 : index
    %c0_95 = arith.constant 0 : index
    %165 = vector.load %arg4[%c17_93, %c16_94, %c0_95] : memref<32x32x16xf32, #tpu.memory_space<vmem>>, vector<1x16x16xf32>
    %166 = vector.shape_cast %165 : vector<1x16x16xf32> to vector<16x16xf32>
    %167 = vector.shape_cast %164 : vector<16x16xf32> to vector<1x16x16xf32>
    tpu.vector_store %arg4[%c17_93, %c16_94, %c0_95], %167 {strides = array<i32>} : memref<32x32x16xf32, #tpu.memory_space<vmem>>, vector<1x16x16xf32>,
    %168 = vector.extract_strided_slice %5 {offsets = [288, 0], sizes = [16, 32], strides = [1, 1]} : vector<512x32xf32> to vector<16x32xf32>
    %169 = vector.extract_strided_slice %168 {offsets = [0, 0], sizes = [16, 16], strides = [1, 1]} : vector<16x32xf32> to vector<16x16xf32>
    %c18 = arith.constant 18 : index
    %c0_96 = arith.constant 0 : index
    %c0_97 = arith.constant 0 : index
    %170 = vector.load %arg4[%c18, %c0_96, %c0_97] : memref<32x32x16xf32, #tpu.memory_space<vmem>>, vector<1x16x16xf32>
    %171 = vector.shape_cast %170 : vector<1x16x16xf32> to vector<16x16xf32>
    %172 = vector.shape_cast %169 : vector<16x16xf32> to vector<1x16x16xf32>
    tpu.vector_store %arg4[%c18, %c0_96, %c0_97], %172 {strides = array<i32>} : memref<32x32x16xf32, #tpu.memory_space<vmem>>, vector<1x16x16xf32>,
    %173 = vector.extract_strided_slice %168 {offsets = [0, 16], sizes = [16, 16], strides = [1, 1]} : vector<16x32xf32> to vector<16x16xf32>
    %c18_98 = arith.constant 18 : index
    %c16_99 = arith.constant 16 : index
    %c0_100 = arith.constant 0 : index
    %174 = vector.load %arg4[%c18_98, %c16_99, %c0_100] : memref<32x32x16xf32, #tpu.memory_space<vmem>>, vector<1x16x16xf32>
    %175 = vector.shape_cast %174 : vector<1x16x16xf32> to vector<16x16xf32>
    %176 = vector.shape_cast %173 : vector<16x16xf32> to vector<1x16x16xf32>
    tpu.vector_store %arg4[%c18_98, %c16_99, %c0_100], %176 {strides = array<i32>} : memref<32x32x16xf32, #tpu.memory_space<vmem>>, vector<1x16x16xf32>,
    %177 = vector.extract_strided_slice %5 {offsets = [304, 0], sizes = [16, 32], strides = [1, 1]} : vector<512x32xf32> to vector<16x32xf32>
    %178 = vector.extract_strided_slice %177 {offsets = [0, 0], sizes = [16, 16], strides = [1, 1]} : vector<16x32xf32> to vector<16x16xf32>
    %c19 = arith.constant 19 : index
    %c0_101 = arith.constant 0 : index
    %c0_102 = arith.constant 0 : index
    %179 = vector.load %arg4[%c19, %c0_101, %c0_102] : memref<32x32x16xf32, #tpu.memory_space<vmem>>, vector<1x16x16xf32>
    %180 = vector.shape_cast %179 : vector<1x16x16xf32> to vector<16x16xf32>
    %181 = vector.shape_cast %178 : vector<16x16xf32> to vector<1x16x16xf32>
    tpu.vector_store %arg4[%c19, %c0_101, %c0_102], %181 {strides = array<i32>} : memref<32x32x16xf32, #tpu.memory_space<vmem>>, vector<1x16x16xf32>,
    %182 = vector.extract_strided_slice %177 {offsets = [0, 16], sizes = [16, 16], strides = [1, 1]} : vector<16x32xf32> to vector<16x16xf32>
    %c19_103 = arith.constant 19 : index
    %c16_104 = arith.constant 16 : index
    %c0_105 = arith.constant 0 : index
    %183 = vector.load %arg4[%c19_103, %c16_104, %c0_105] : memref<32x32x16xf32, #tpu.memory_space<vmem>>, vector<1x16x16xf32>
    %184 = vector.shape_cast %183 : vector<1x16x16xf32> to vector<16x16xf32>
    %185 = vector.shape_cast %182 : vector<16x16xf32> to vector<1x16x16xf32>
    tpu.vector_store %arg4[%c19_103, %c16_104, %c0_105], %185 {strides = array<i32>} : memref<32x32x16xf32, #tpu.memory_space<vmem>>, vector<1x16x16xf32>,
    %186 = vector.extract_strided_slice %5 {offsets = [320, 0], sizes = [16, 32], strides = [1, 1]} : vector<512x32xf32> to vector<16x32xf32>
    %187 = vector.extract_strided_slice %186 {offsets = [0, 0], sizes = [16, 16], strides = [1, 1]} : vector<16x32xf32> to vector<16x16xf32>
    %c20 = arith.constant 20 : index
    %c0_106 = arith.constant 0 : index
    %c0_107 = arith.constant 0 : index
    %188 = vector.load %arg4[%c20, %c0_106, %c0_107] : memref<32x32x16xf32, #tpu.memory_space<vmem>>, vector<1x16x16xf32>
    %189 = vector.shape_cast %188 : vector<1x16x16xf32> to vector<16x16xf32>
    %190 = vector.shape_cast %187 : vector<16x16xf32> to vector<1x16x16xf32>
    tpu.vector_store %arg4[%c20, %c0_106, %c0_107], %190 {strides = array<i32>} : memref<32x32x16xf32, #tpu.memory_space<vmem>>, vector<1x16x16xf32>,
    %191 = vector.extract_strided_slice %186 {offsets = [0, 16], sizes = [16, 16], strides = [1, 1]} : vector<16x32xf32> to vector<16x16xf32>
    %c20_108 = arith.constant 20 : index
    %c16_109 = arith.constant 16 : index
    %c0_110 = arith.constant 0 : index
    %192 = vector.load %arg4[%c20_108, %c16_109, %c0_110] : memref<32x32x16xf32, #tpu.memory_space<vmem>>, vector<1x16x16xf32>
    %193 = vector.shape_cast %192 : vector<1x16x16xf32> to vector<16x16xf32>
    %194 = vector.shape_cast %191 : vector<16x16xf32> to vector<1x16x16xf32>
    tpu.vector_store %arg4[%c20_108, %c16_109, %c0_110], %194 {strides = array<i32>} : memref<32x32x16xf32, #tpu.memory_space<vmem>>, vector<1x16x16xf32>,
    %195 = vector.extract_strided_slice %5 {offsets = [336, 0], sizes = [16, 32], strides = [1, 1]} : vector<512x32xf32> to vector<16x32xf32>
    %196 = vector.extract_strided_slice %195 {offsets = [0, 0], sizes = [16, 16], strides = [1, 1]} : vector<16x32xf32> to vector<16x16xf32>
    %c21 = arith.constant 21 : index
    %c0_111 = arith.constant 0 : index
    %c0_112 = arith.constant 0 : index
    %197 = vector.load %arg4[%c21, %c0_111, %c0_112] : memref<32x32x16xf32, #tpu.memory_space<vmem>>, vector<1x16x16xf32>
    %198 = vector.shape_cast %197 : vector<1x16x16xf32> to vector<16x16xf32>
    %199 = vector.shape_cast %196 : vector<16x16xf32> to vector<1x16x16xf32>
    tpu.vector_store %arg4[%c21, %c0_111, %c0_112], %199 {strides = array<i32>} : memref<32x32x16xf32, #tpu.memory_space<vmem>>, vector<1x16x16xf32>,
    %200 = vector.extract_strided_slice %195 {offsets = [0, 16], sizes = [16, 16], strides = [1, 1]} : vector<16x32xf32> to vector<16x16xf32>
    %c21_113 = arith.constant 21 : index
    %c16_114 = arith.constant 16 : index
    %c0_115 = arith.constant 0 : index
    %201 = vector.load %arg4[%c21_113, %c16_114, %c0_115] : memref<32x32x16xf32, #tpu.memory_space<vmem>>, vector<1x16x16xf32>
    %202 = vector.shape_cast %201 : vector<1x16x16xf32> to vector<16x16xf32>
    %203 = vector.shape_cast %200 : vector<16x16xf32> to vector<1x16x16xf32>
    tpu.vector_store %arg4[%c21_113, %c16_114, %c0_115], %203 {strides = array<i32>} : memref<32x32x16xf32, #tpu.memory_space<vmem>>, vector<1x16x16xf32>,
    %204 = vector.extract_strided_slice %5 {offsets = [352, 0], sizes = [16, 32], strides = [1, 1]} : vector<512x32xf32> to vector<16x32xf32>
    %205 = vector.extract_strided_slice %204 {offsets = [0, 0], sizes = [16, 16], strides = [1, 1]} : vector<16x32xf32> to vector<16x16xf32>
    %c22 = arith.constant 22 : index
    %c0_116 = arith.constant 0 : index
    %c0_117 = arith.constant 0 : index
    %206 = vector.load %arg4[%c22, %c0_116, %c0_117] : memref<32x32x16xf32, #tpu.memory_space<vmem>>, vector<1x16x16xf32>
    %207 = vector.shape_cast %206 : vector<1x16x16xf32> to vector<16x16xf32>
    %208 = vector.shape_cast %205 : vector<16x16xf32> to vector<1x16x16xf32>
    tpu.vector_store %arg4[%c22, %c0_116, %c0_117], %208 {strides = array<i32>} : memref<32x32x16xf32, #tpu.memory_space<vmem>>, vector<1x16x16xf32>,
    %209 = vector.extract_strided_slice %204 {offsets = [0, 16], sizes = [16, 16], strides = [1, 1]} : vector<16x32xf32> to vector<16x16xf32>
    %c22_118 = arith.constant 22 : index
    %c16_119 = arith.constant 16 : index
    %c0_120 = arith.constant 0 : index
    %210 = vector.load %arg4[%c22_118, %c16_119, %c0_120] : memref<32x32x16xf32, #tpu.memory_space<vmem>>, vector<1x16x16xf32>
    %211 = vector.shape_cast %210 : vector<1x16x16xf32> to vector<16x16xf32>
    %212 = vector.shape_cast %209 : vector<16x16xf32> to vector<1x16x16xf32>
    tpu.vector_store %arg4[%c22_118, %c16_119, %c0_120], %212 {strides = array<i32>} : memref<32x32x16xf32, #tpu.memory_space<vmem>>, vector<1x16x16xf32>,
    %213 = vector.extract_strided_slice %5 {offsets = [368, 0], sizes = [16, 32], strides = [1, 1]} : vector<512x32xf32> to vector<16x32xf32>
    %214 = vector.extract_strided_slice %213 {offsets = [0, 0], sizes = [16, 16], strides = [1, 1]} : vector<16x32xf32> to vector<16x16xf32>
    %c23 = arith.constant 23 : index
    %c0_121 = arith.constant 0 : index
    %c0_122 = arith.constant 0 : index
    %215 = vector.load %arg4[%c23, %c0_121, %c0_122] : memref<32x32x16xf32, #tpu.memory_space<vmem>>, vector<1x16x16xf32>
    %216 = vector.shape_cast %215 : vector<1x16x16xf32> to vector<16x16xf32>
    %217 = vector.shape_cast %214 : vector<16x16xf32> to vector<1x16x16xf32>
    tpu.vector_store %arg4[%c23, %c0_121, %c0_122], %217 {strides = array<i32>} : memref<32x32x16xf32, #tpu.memory_space<vmem>>, vector<1x16x16xf32>,
    %218 = vector.extract_strided_slice %213 {offsets = [0, 16], sizes = [16, 16], strides = [1, 1]} : vector<16x32xf32> to vector<16x16xf32>
    %c23_123 = arith.constant 23 : index
    %c16_124 = arith.constant 16 : index
    %c0_125 = arith.constant 0 : index
    %219 = vector.load %arg4[%c23_123, %c16_124, %c0_125] : memref<32x32x16xf32, #tpu.memory_space<vmem>>, vector<1x16x16xf32>
    %220 = vector.shape_cast %219 : vector<1x16x16xf32> to vector<16x16xf32>
    %221 = vector.shape_cast %218 : vector<16x16xf32> to vector<1x16x16xf32>
    tpu.vector_store %arg4[%c23_123, %c16_124, %c0_125], %221 {strides = array<i32>} : memref<32x32x16xf32, #tpu.memory_space<vmem>>, vector<1x16x16xf32>,
    %222 = vector.extract_strided_slice %5 {offsets = [384, 0], sizes = [16, 32], strides = [1, 1]} : vector<512x32xf32> to vector<16x32xf32>
    %223 = vector.extract_strided_slice %222 {offsets = [0, 0], sizes = [16, 16], strides = [1, 1]} : vector<16x32xf32> to vector<16x16xf32>
    %c24 = arith.constant 24 : index
    %c0_126 = arith.constant 0 : index
    %c0_127 = arith.constant 0 : index
    %224 = vector.load %arg4[%c24, %c0_126, %c0_127] : memref<32x32x16xf32, #tpu.memory_space<vmem>>, vector<1x16x16xf32>
    %225 = vector.shape_cast %224 : vector<1x16x16xf32> to vector<16x16xf32>
    %226 = vector.shape_cast %223 : vector<16x16xf32> to vector<1x16x16xf32>
    tpu.vector_store %arg4[%c24, %c0_126, %c0_127], %226 {strides = array<i32>} : memref<32x32x16xf32, #tpu.memory_space<vmem>>, vector<1x16x16xf32>,
    %227 = vector.extract_strided_slice %222 {offsets = [0, 16], sizes = [16, 16], strides = [1, 1]} : vector<16x32xf32> to vector<16x16xf32>
    %c24_128 = arith.constant 24 : index
    %c16_129 = arith.constant 16 : index
    %c0_130 = arith.constant 0 : index
    %228 = vector.load %arg4[%c24_128, %c16_129, %c0_130] : memref<32x32x16xf32, #tpu.memory_space<vmem>>, vector<1x16x16xf32>
    %229 = vector.shape_cast %228 : vector<1x16x16xf32> to vector<16x16xf32>
    %230 = vector.shape_cast %227 : vector<16x16xf32> to vector<1x16x16xf32>
    tpu.vector_store %arg4[%c24_128, %c16_129, %c0_130], %230 {strides = array<i32>} : memref<32x32x16xf32, #tpu.memory_space<vmem>>, vector<1x16x16xf32>,
    %231 = vector.extract_strided_slice %5 {offsets = [400, 0], sizes = [16, 32], strides = [1, 1]} : vector<512x32xf32> to vector<16x32xf32>
    %232 = vector.extract_strided_slice %231 {offsets = [0, 0], sizes = [16, 16], strides = [1, 1]} : vector<16x32xf32> to vector<16x16xf32>
    %c25 = arith.constant 25 : index
    %c0_131 = arith.constant 0 : index
    %c0_132 = arith.constant 0 : index
    %233 = vector.load %arg4[%c25, %c0_131, %c0_132] : memref<32x32x16xf32, #tpu.memory_space<vmem>>, vector<1x16x16xf32>
    %234 = vector.shape_cast %233 : vector<1x16x16xf32> to vector<16x16xf32>
    %235 = vector.shape_cast %232 : vector<16x16xf32> to vector<1x16x16xf32>
    tpu.vector_store %arg4[%c25, %c0_131, %c0_132], %235 {strides = array<i32>} : memref<32x32x16xf32, #tpu.memory_space<vmem>>, vector<1x16x16xf32>,
    %236 = vector.extract_strided_slice %231 {offsets = [0, 16], sizes = [16, 16], strides = [1, 1]} : vector<16x32xf32> to vector<16x16xf32>
    %c25_133 = arith.constant 25 : index
    %c16_134 = arith.constant 16 : index
    %c0_135 = arith.constant 0 : index
    %237 = vector.load %arg4[%c25_133, %c16_134, %c0_135] : memref<32x32x16xf32, #tpu.memory_space<vmem>>, vector<1x16x16xf32>
    %238 = vector.shape_cast %237 : vector<1x16x16xf32> to vector<16x16xf32>
    %239 = vector.shape_cast %236 : vector<16x16xf32> to vector<1x16x16xf32>
    tpu.vector_store %arg4[%c25_133, %c16_134, %c0_135], %239 {strides = array<i32>} : memref<32x32x16xf32, #tpu.memory_space<vmem>>, vector<1x16x16xf32>,
    %240 = vector.extract_strided_slice %5 {offsets = [416, 0], sizes = [16, 32], strides = [1, 1]} : vector<512x32xf32> to vector<16x32xf32>
    %241 = vector.extract_strided_slice %240 {offsets = [0, 0], sizes = [16, 16], strides = [1, 1]} : vector<16x32xf32> to vector<16x16xf32>
    %c26 = arith.constant 26 : index
    %c0_136 = arith.constant 0 : index
    %c0_137 = arith.constant 0 : index
    %242 = vector.load %arg4[%c26, %c0_136, %c0_137] : memref<32x32x16xf32, #tpu.memory_space<vmem>>, vector<1x16x16xf32>
    %243 = vector.shape_cast %242 : vector<1x16x16xf32> to vector<16x16xf32>
    %244 = vector.shape_cast %241 : vector<16x16xf32> to vector<1x16x16xf32>
    tpu.vector_store %arg4[%c26, %c0_136, %c0_137], %244 {strides = array<i32>} : memref<32x32x16xf32, #tpu.memory_space<vmem>>, vector<1x16x16xf32>,
    %245 = vector.extract_strided_slice %240 {offsets = [0, 16], sizes = [16, 16], strides = [1, 1]} : vector<16x32xf32> to vector<16x16xf32>
    %c26_138 = arith.constant 26 : index
    %c16_139 = arith.constant 16 : index
    %c0_140 = arith.constant 0 : index
    %246 = vector.load %arg4[%c26_138, %c16_139, %c0_140] : memref<32x32x16xf32, #tpu.memory_space<vmem>>, vector<1x16x16xf32>
    %247 = vector.shape_cast %246 : vector<1x16x16xf32> to vector<16x16xf32>
    %248 = vector.shape_cast %245 : vector<16x16xf32> to vector<1x16x16xf32>
    tpu.vector_store %arg4[%c26_138, %c16_139, %c0_140], %248 {strides = array<i32>} : memref<32x32x16xf32, #tpu.memory_space<vmem>>, vector<1x16x16xf32>,
    %249 = vector.extract_strided_slice %5 {offsets = [432, 0], sizes = [16, 32], strides = [1, 1]} : vector<512x32xf32> to vector<16x32xf32>
    %250 = vector.extract_strided_slice %249 {offsets = [0, 0], sizes = [16, 16], strides = [1, 1]} : vector<16x32xf32> to vector<16x16xf32>
    %c27 = arith.constant 27 : index
    %c0_141 = arith.constant 0 : index
    %c0_142 = arith.constant 0 : index
    %251 = vector.load %arg4[%c27, %c0_141, %c0_142] : memref<32x32x16xf32, #tpu.memory_space<vmem>>, vector<1x16x16xf32>
    %252 = vector.shape_cast %251 : vector<1x16x16xf32> to vector<16x16xf32>
    %253 = vector.shape_cast %250 : vector<16x16xf32> to vector<1x16x16xf32>
    tpu.vector_store %arg4[%c27, %c0_141, %c0_142], %253 {strides = array<i32>} : memref<32x32x16xf32, #tpu.memory_space<vmem>>, vector<1x16x16xf32>,
    %254 = vector.extract_strided_slice %249 {offsets = [0, 16], sizes = [16, 16], strides = [1, 1]} : vector<16x32xf32> to vector<16x16xf32>
    %c27_143 = arith.constant 27 : index
    %c16_144 = arith.constant 16 : index
    %c0_145 = arith.constant 0 : index
    %255 = vector.load %arg4[%c27_143, %c16_144, %c0_145] : memref<32x32x16xf32, #tpu.memory_space<vmem>>, vector<1x16x16xf32>
    %256 = vector.shape_cast %255 : vector<1x16x16xf32> to vector<16x16xf32>
    %257 = vector.shape_cast %254 : vector<16x16xf32> to vector<1x16x16xf32>
    tpu.vector_store %arg4[%c27_143, %c16_144, %c0_145], %257 {strides = array<i32>} : memref<32x32x16xf32, #tpu.memory_space<vmem>>, vector<1x16x16xf32>,
    %258 = vector.extract_strided_slice %5 {offsets = [448, 0], sizes = [16, 32], strides = [1, 1]} : vector<512x32xf32> to vector<16x32xf32>
    %259 = vector.extract_strided_slice %258 {offsets = [0, 0], sizes = [16, 16], strides = [1, 1]} : vector<16x32xf32> to vector<16x16xf32>
    %c28 = arith.constant 28 : index
    %c0_146 = arith.constant 0 : index
    %c0_147 = arith.constant 0 : index
    %260 = vector.load %arg4[%c28, %c0_146, %c0_147] : memref<32x32x16xf32, #tpu.memory_space<vmem>>, vector<1x16x16xf32>
    %261 = vector.shape_cast %260 : vector<1x16x16xf32> to vector<16x16xf32>
    %262 = vector.shape_cast %259 : vector<16x16xf32> to vector<1x16x16xf32>
    tpu.vector_store %arg4[%c28, %c0_146, %c0_147], %262 {strides = array<i32>} : memref<32x32x16xf32, #tpu.memory_space<vmem>>, vector<1x16x16xf32>,
    %263 = vector.extract_strided_slice %258 {offsets = [0, 16], sizes = [16, 16], strides = [1, 1]} : vector<16x32xf32> to vector<16x16xf32>
    %c28_148 = arith.constant 28 : index
    %c16_149 = arith.constant 16 : index
    %c0_150 = arith.constant 0 : index
    %264 = vector.load %arg4[%c28_148, %c16_149, %c0_150] : memref<32x32x16xf32, #tpu.memory_space<vmem>>, vector<1x16x16xf32>
    %265 = vector.shape_cast %264 : vector<1x16x16xf32> to vector<16x16xf32>
    %266 = vector.shape_cast %263 : vector<16x16xf32> to vector<1x16x16xf32>
    tpu.vector_store %arg4[%c28_148, %c16_149, %c0_150], %266 {strides = array<i32>} : memref<32x32x16xf32, #tpu.memory_space<vmem>>, vector<1x16x16xf32>,
    %267 = vector.extract_strided_slice %5 {offsets = [464, 0], sizes = [16, 32], strides = [1, 1]} : vector<512x32xf32> to vector<16x32xf32>
    %268 = vector.extract_strided_slice %267 {offsets = [0, 0], sizes = [16, 16], strides = [1, 1]} : vector<16x32xf32> to vector<16x16xf32>
    %c29 = arith.constant 29 : index
    %c0_151 = arith.constant 0 : index
    %c0_152 = arith.constant 0 : index
    %269 = vector.load %arg4[%c29, %c0_151, %c0_152] : memref<32x32x16xf32, #tpu.memory_space<vmem>>, vector<1x16x16xf32>
    %270 = vector.shape_cast %269 : vector<1x16x16xf32> to vector<16x16xf32>
    %271 = vector.shape_cast %268 : vector<16x16xf32> to vector<1x16x16xf32>
    tpu.vector_store %arg4[%c29, %c0_151, %c0_152], %271 {strides = array<i32>} : memref<32x32x16xf32, #tpu.memory_space<vmem>>, vector<1x16x16xf32>,
    %272 = vector.extract_strided_slice %267 {offsets = [0, 16], sizes = [16, 16], strides = [1, 1]} : vector<16x32xf32> to vector<16x16xf32>
    %c29_153 = arith.constant 29 : index
    %c16_154 = arith.constant 16 : index
    %c0_155 = arith.constant 0 : index
    %273 = vector.load %arg4[%c29_153, %c16_154, %c0_155] : memref<32x32x16xf32, #tpu.memory_space<vmem>>, vector<1x16x16xf32>
    %274 = vector.shape_cast %273 : vector<1x16x16xf32> to vector<16x16xf32>
    %275 = vector.shape_cast %272 : vector<16x16xf32> to vector<1x16x16xf32>
    tpu.vector_store %arg4[%c29_153, %c16_154, %c0_155], %275 {strides = array<i32>} : memref<32x32x16xf32, #tpu.memory_space<vmem>>, vector<1x16x16xf32>,
    %276 = vector.extract_strided_slice %5 {offsets = [480, 0], sizes = [16, 32], strides = [1, 1]} : vector<512x32xf32> to vector<16x32xf32>
    %277 = vector.extract_strided_slice %276 {offsets = [0, 0], sizes = [16, 16], strides = [1, 1]} : vector<16x32xf32> to vector<16x16xf32>
    %c30 = arith.constant 30 : index
    %c0_156 = arith.constant 0 : index
    %c0_157 = arith.constant 0 : index
    %278 = vector.load %arg4[%c30, %c0_156, %c0_157] : memref<32x32x16xf32, #tpu.memory_space<vmem>>, vector<1x16x16xf32>
    %279 = vector.shape_cast %278 : vector<1x16x16xf32> to vector<16x16xf32>
    %280 = vector.shape_cast %277 : vector<16x16xf32> to vector<1x16x16xf32>
    tpu.vector_store %arg4[%c30, %c0_156, %c0_157], %280 {strides = array<i32>} : memref<32x32x16xf32, #tpu.memory_space<vmem>>, vector<1x16x16xf32>,
    %281 = vector.extract_strided_slice %276 {offsets = [0, 16], sizes = [16, 16], strides = [1, 1]} : vector<16x32xf32> to vector<16x16xf32>
    %c30_158 = arith.constant 30 : index
    %c16_159 = arith.constant 16 : index
    %c0_160 = arith.constant 0 : index
    %282 = vector.load %arg4[%c30_158, %c16_159, %c0_160] : memref<32x32x16xf32, #tpu.memory_space<vmem>>, vector<1x16x16xf32>
    %283 = vector.shape_cast %282 : vector<1x16x16xf32> to vector<16x16xf32>
    %284 = vector.shape_cast %281 : vector<16x16xf32> to vector<1x16x16xf32>
    tpu.vector_store %arg4[%c30_158, %c16_159, %c0_160], %284 {strides = array<i32>} : memref<32x32x16xf32, #tpu.memory_space<vmem>>, vector<1x16x16xf32>,
    %285 = vector.extract_strided_slice %5 {offsets = [496, 0], sizes = [16, 32], strides = [1, 1]} : vector<512x32xf32> to vector<16x32xf32>
    %286 = vector.extract_strided_slice %285 {offsets = [0, 0], sizes = [16, 16], strides = [1, 1]} : vector<16x32xf32> to vector<16x16xf32>
    %c31 = arith.constant 31 : index
    %c0_161 = arith.constant 0 : index
    %c0_162 = arith.constant 0 : index
    %287 = vector.load %arg4[%c31, %c0_161, %c0_162] : memref<32x32x16xf32, #tpu.memory_space<vmem>>, vector<1x16x16xf32>
    %288 = vector.shape_cast %287 : vector<1x16x16xf32> to vector<16x16xf32>
    %289 = vector.shape_cast %286 : vector<16x16xf32> to vector<1x16x16xf32>
    tpu.vector_store %arg4[%c31, %c0_161, %c0_162], %289 {strides = array<i32>} : memref<32x32x16xf32, #tpu.memory_space<vmem>>, vector<1x16x16xf32>,
    %290 = vector.extract_strided_slice %285 {offsets = [0, 16], sizes = [16, 16], strides = [1, 1]} : vector<16x32xf32> to vector<16x16xf32>
    %c31_163 = arith.constant 31 : index
    %c16_164 = arith.constant 16 : index
    %c0_165 = arith.constant 0 : index
    %291 = vector.load %arg4[%c31_163, %c16_164, %c0_165] : memref<32x32x16xf32, #tpu.memory_space<vmem>>, vector<1x16x16xf32>
    %292 = vector.shape_cast %291 : vector<1x16x16xf32> to vector<16x16xf32>
    %293 = vector.shape_cast %290 : vector<16x16xf32> to vector<1x16x16xf32>
    tpu.vector_store %arg4[%c31_163, %c16_164, %c0_165], %293 {strides = array<i32>} : memref<32x32x16xf32, #tpu.memory_space<vmem>>, vector<1x16x16xf32>,
    return
  }
  func.func @transform_0(%arg0: i32) -> (i32, i32) {
    %c0_i32 = arith.constant 0 : i32
    %c0_i32_0 = arith.constant 0 : i32
    return %arg0, %c0_i32 : i32, i32
  }
  func.func @transform_1(%arg0: i32) -> (i32, i32) {
    %c0_i32 = arith.constant 0 : i32
    %c0_i32_0 = arith.constant 0 : i32
    %c0_i32_1 = arith.constant 0 : i32
    return %c0_i32, %c0_i32_0 : i32, i32
  }
  func.func @transform_2(%arg0: i32) -> (i32, i32) {
    %c0_i32 = arith.constant 0 : i32
    %c0_i32_0 = arith.constant 0 : i32
    %c0_i32_1 = arith.constant 0 : i32
    return %c0_i32, %c0_i32_0 : i32, i32
  }
  func.func @transform_3(%arg0: i32) -> (i32, i32, i32) {
    %c0_i32 = arith.constant 0 : i32
    %c0_i32_0 = arith.constant 0 : i32
    %c0_i32_1 = arith.constant 0 : i32
    return %arg0, %c0_i32, %c0_i32_0 : i32, i32, i32
  }
}

</mosaic_0001>

<llo_original>
// kernel: tile.8
$region0: #{tile.8}
  #allocation0 [shape = 's32[1]{0}', space=sflag, size = 0x4, scoped, tag = 'scoped memory for tile.8']
  %s0 = inlined_call_operand.vmem [shape: f32[8], index: 0, kind: input, shape index: {}]
  %s1 = inlined_call_operand.vmem [shape: f32[4,8], index: 1, kind: output, shape index: {}]
  // Predicated region
  $region2: #{tile.8} parent=0 // pred_check
    _
  $region3: #{tile.8} parent=0 // pred_check_branch
    %3 = sbr.rel (0) target = $region5
  $region4: #{tile.8} parent=0 // pred_region
    _
  $region5: #{tile.8} parent=0 // pred_fallthru
    _
  %v4 = vld [vmem:[%s0] ss:$0 sm:$0xff]
  %5 = vst [vmem:[%s1] sm:$0xf] %v4

// kernel: tile.9
$region0: #{tile.9}
  %s0 = inlined_call_operand.vmem [shape: f32[4,8], index: 0, kind: input, shape index: {}]
  %s1 = inlined_call_operand.vmem [shape: f32[1,32], index: 1, kind: output, shape index: {}]
  $region1: #{tile.9} parent=0
    #allocation0 [shape = 'u8[4096]{0}', space=vmem, size = 0x1000, scoped, tag = 'scoped mem for output reshape']
    #allocation1 [shape = 'u8[4096]{0}', space=vmem, size = 0x1000, scoped, tag = 'scoped mem for input reshape']
    %s3 = sshll.u32 1, 4
    %s4 = ssub.s32 %s3, 1
    %v5 = vld [vmem:[%s0] sm:%s4]
    %6 = vst [vmem:[#allocation1] sm:%s4] %v5
    %v7 = vld [vmem:[#allocation1] sm:$0x1]
    %vm8 = vcmask 64512
    %9 = vst.msk [vmem:[#allocation0] sm:$0x1] %vm8, %v7
    %s10 = scalar_lea.vmem [#allocation1], 3
    %v11 = vld [vmem:[%s10] sm:$0x1]
    %12 = vrot.lane.b32.xlu0 %v11, 24
    %v13 = vpop.permute.xlu0 %12
    %vm14 = vcmask 261312
    %15 = vst.msk [vmem:[#allocation0] sm:$0x1] %vm14, %v13
    %s16 = scalar_lea.vmem [#allocation1], 2
    %v17 = vld [vmem:[%s16] sm:$0x1]
    %18 = vrot.lane.b32.xlu0 %v17, 16
    %v19 = vpop.permute.xlu0 %18
    %vm20 = vcmask 195712
    %21 = vst.msk [vmem:[#allocation0] sm:$0x1] %vm20, %v19
    %s22 = scalar_lea.vmem [#allocation1], 1
    %v23 = vld [vmem:[%s22] sm:$0x1]
    %24 = vrot.lane.b32.xlu0 %v23, 8
    %v25 = vpop.permute.xlu0 %24
    %vm26 = vcmask 130112
    %27 = vst.msk [vmem:[#allocation0] sm:$0x1] %vm26, %v25
    %s29 = sshll.u32 1, 1
    %s30 = ssub.s32 %s29, 1
    %v32 = vld [vmem:[#allocation0] sm:%s30]
    %s33 = sshll.u32 1, 1
    %s34 = ssub.s32 %s33, 1
    %35 = vst [vmem:[%s1] sm:%s34] %v32

// kernel: upsample_conv_transpose2d.1
$region0: #{upsample_conv_transpose2d.1}
  #allocation0 [shape = 'u32[]', space=smem, size = 0x4, offset = 0x4, fixed_abs, tag = 'smem constant byte address 0x4 - core index']
  #allocation1 [shape = 'u32[144,128]{1,0:T(1,128)}', space=vmem, size = 0x12000, scoped, tag = 'internal scratch']
  %s0 = inlined_call_operand.vmem [shape: f32[512,4], index: 0, kind: input, shape index: {}]
  %s1 = inlined_call_operand.vmem [shape: f32[4,32], index: 1, kind: input, shape index: {}]
  %s2 = inlined_call_operand.vmem [shape: f32[1,32], index: 2, kind: input, shape index: {}]
  %s3 = inlined_call_operand.vmem [shape: f32[32,32,16], index: 3, kind: output, shape index: {}]
  %s4 = sld [smem:[#allocation0]]
  $region22: #{upsample_conv_transpose2d.1} parent=0
    _
  %s6 = ssub.s32 1, %s4
  %s7 = scalar_select 0, %s6, %s4
  // Predicated region
  $region2: #{upsample_conv_transpose2d.1} parent=0 // pred_check
    _
  $region3: #{upsample_conv_transpose2d.1} parent=0 // pred_check_branch
    %9 = sbr.rel (0) target = $region5
  $region4: #{upsample_conv_transpose2d.1} parent=0 // pred_region
    _
  $region5: #{upsample_conv_transpose2d.1} parent=0 // pred_fallthru
    _
  // Predicated region
  $region6: #{upsample_conv_transpose2d.1} parent=0 // pred_check
    _
  $region7: #{upsample_conv_transpose2d.1} parent=0 // pred_check_branch
    %11 = sbr.rel (0) target = $region9
  $region8: #{upsample_conv_transpose2d.1} parent=0 // pred_region
    _
  $region9: #{upsample_conv_transpose2d.1} parent=0 // pred_fallthru
    _
  // Predicated region
  $region10: #{upsample_conv_transpose2d.1} parent=0 // pred_check
    _
  $region11: #{upsample_conv_transpose2d.1} parent=0 // pred_check_branch
    %13 = sbr.rel (0) target = $region13
  $region12: #{upsample_conv_transpose2d.1} parent=0 // pred_region
    _
  $region13: #{upsample_conv_transpose2d.1} parent=0 // pred_fallthru
    _
  %v14 = vld [vmem:[%s0] sm:$0xff]
  %v15 = vld [vmem:[%s0 + $0x8] sm:$0xff]
  %v16 = vld [vmem:[%s0 + $0x10] sm:$0xff]
  %v17 = vld [vmem:[%s0 + $0x18] sm:$0xff]
  %v18 = vld [vmem:[%s0 + $0x20] sm:$0xff]
  %v19 = vld [vmem:[%s0 + $0x28] sm:$0xff]
  %v20 = vld [vmem:[%s0 + $0x30] sm:$0xff]
  %v21 = vld [vmem:[%s0 + $0x38] sm:$0xff]
  %v22 = vld [vmem:[%s0 + $0x40] sm:$0xff]
  %v23 = vld [vmem:[%s0 + $0x48] sm:$0xff]
  %v24 = vld [vmem:[%s0 + $0x50] sm:$0xff]
  %v25 = vld [vmem:[%s0 + $0x58] sm:$0xff]
  %v26 = vld [vmem:[%s0 + $0x60] sm:$0xff]
  %v27 = vld [vmem:[%s0 + $0x68] sm:$0xff]
  %v28 = vld [vmem:[%s0 + $0x70] sm:$0xff]
  %v29 = vld [vmem:[%s0 + $0x78] sm:$0xff]
  %v30 = vld [vmem:[%s0 + $0x80] sm:$0xff]
  %v31 = vld [vmem:[%s0 + $0x88] sm:$0xff]
  %v32 = vld [vmem:[%s0 + $0x90] sm:$0xff]
  %v33 = vld [vmem:[%s0 + $0x98] sm:$0xff]
  %v34 = vld [vmem:[%s0 + $0xa0] sm:$0xff]
  %v35 = vld [vmem:[%s0 + $0xa8] sm:$0xff]
  %v36 = vld [vmem:[%s0 + $0xb0] sm:$0xff]
  %v37 = vld [vmem:[%s0 + $0xb8] sm:$0xff]
  %v38 = vld [vmem:[%s0 + $0xc0] sm:$0xff]
  %v39 = vld [vmem:[%s0 + $0xc8] sm:$0xff]
  %v40 = vld [vmem:[%s0 + $0xd0] sm:$0xff]
  %v41 = vld [vmem:[%s0 + $0xd8] sm:$0xff]
  %v42 = vld [vmem:[%s0 + $0xe0] sm:$0xff]
  %v43 = vld [vmem:[%s0 + $0xe8] sm:$0xff]
  %v44 = vld [vmem:[%s0 + $0xf0] sm:$0xff]
  %v45 = vld [vmem:[%s0 + $0xf8] sm:$0xff]
  %v46 = vld [vmem:[%s0 + $0x100] sm:$0xff]
  %v47 = vld [vmem:[%s0 + $0x108] sm:$0xff]
  %v48 = vld [vmem:[%s0 + $0x110] sm:$0xff]
  %v49 = vld [vmem:[%s0 + $0x118] sm:$0xff]
  %v50 = vld [vmem:[%s0 + $0x120] sm:$0xff]
  %v51 = vld [vmem:[%s0 + $0x128] sm:$0xff]
  %v52 = vld [vmem:[%s0 + $0x130] sm:$0xff]
  %v53 = vld [vmem:[%s0 + $0x138] sm:$0xff]
  %v54 = vld [vmem:[%s0 + $0x140] sm:$0xff]
  %v55 = vld [vmem:[%s0 + $0x148] sm:$0xff]
  %v56 = vld [vmem:[%s0 + $0x150] sm:$0xff]
  %v57 = vld [vmem:[%s0 + $0x158] sm:$0xff]
  %v58 = vld [vmem:[%s0 + $0x160] sm:$0xff]
  %v59 = vld [vmem:[%s0 + $0x168] sm:$0xff]
  %v60 = vld [vmem:[%s0 + $0x170] sm:$0xff]
  %v61 = vld [vmem:[%s0 + $0x178] sm:$0xff]
  %v62 = vld [vmem:[%s0 + $0x180] sm:$0xff]
  %v63 = vld [vmem:[%s0 + $0x188] sm:$0xff]
  %v64 = vld [vmem:[%s0 + $0x190] sm:$0xff]
  %v65 = vld [vmem:[%s0 + $0x198] sm:$0xff]
  %v66 = vld [vmem:[%s0 + $0x1a0] sm:$0xff]
  %v67 = vld [vmem:[%s0 + $0x1a8] sm:$0xff]
  %v68 = vld [vmem:[%s0 + $0x1b0] sm:$0xff]
  %v69 = vld [vmem:[%s0 + $0x1b8] sm:$0xff]
  %v70 = vld [vmem:[%s0 + $0x1c0] sm:$0xff]
  %v71 = vld [vmem:[%s0 + $0x1c8] sm:$0xff]
  %v72 = vld [vmem:[%s0 + $0x1d0] sm:$0xff]
  %v73 = vld [vmem:[%s0 + $0x1d8] sm:$0xff]
  %v74 = vld [vmem:[%s0 + $0x1e0] sm:$0xff]
  %v75 = vld [vmem:[%s0 + $0x1e8] sm:$0xff]
  %v76 = vld [vmem:[%s0 + $0x1f0] sm:$0xff]
  %v77 = vld [vmem:[%s0 + $0x1f8] sm:$0xff]
  %v78 = vld [vmem:[%s1] sm:$0xf]
  %v79 = vld [vmem:[%s2] sm:$0x1]
  %v81 = vlaneseq
  %v82 = vshrl.u32 %v81, 7
  %v83 = vsub.s32 0, %v82
  %v84 = vrot.slane %v79, %v83
  %vm86 = vcmask 31744
  %v88 = vsel %vm86, %v14, 0
  %v91 = vsel %vm86, %v15, 0
  %v94 = vsel %vm86, %v16, 0
  %v97 = vsel %vm86, %v17, 0
  %v100 = vsel %vm86, %v18, 0
  %v103 = vsel %vm86, %v19, 0
  %v106 = vsel %vm86, %v20, 0
  %v109 = vsel %vm86, %v21, 0
  %v112 = vsel %vm86, %v22, 0
  %v115 = vsel %vm86, %v23, 0
  %v118 = vsel %vm86, %v24, 0
  %v121 = vsel %vm86, %v25, 0
  %v124 = vsel %vm86, %v26, 0
  %v127 = vsel %vm86, %v27, 0
  %v130 = vsel %vm86, %v28, 0
  %v133 = vsel %vm86, %v29, 0
  %v136 = vsel %vm86, %v30, 0
  %v139 = vsel %vm86, %v31, 0
  %v142 = vsel %vm86, %v32, 0
  %v145 = vsel %vm86, %v33, 0
  %v148 = vsel %vm86, %v34, 0
  %v151 = vsel %vm86, %v35, 0
  %v154 = vsel %vm86, %v36, 0
  %v157 = vsel %vm86, %v37, 0
  %v160 = vsel %vm86, %v38, 0
  %v163 = vsel %vm86, %v39, 0
  %v166 = vsel %vm86, %v40, 0
  %v169 = vsel %vm86, %v41, 0
  %v172 = vsel %vm86, %v42, 0
  %v175 = vsel %vm86, %v43, 0
  %v178 = vsel %vm86, %v44, 0
  %v181 = vsel %vm86, %v45, 0
  %v184 = vsel %vm86, %v46, 0
  %v187 = vsel %vm86, %v47, 0
  %v190 = vsel %vm86, %v48, 0
  %v193 = vsel %vm86, %v49, 0
  %v196 = vsel %vm86, %v50, 0
  %v199 = vsel %vm86, %v51, 0
  %v202 = vsel %vm86, %v52, 0
  %v205 = vsel %vm86, %v53, 0
  %v208 = vsel %vm86, %v54, 0
  %v211 = vsel %vm86, %v55, 0
  %v214 = vsel %vm86, %v56, 0
  %v217 = vsel %vm86, %v57, 0
  %v220 = vsel %vm86, %v58, 0
  %v223 = vsel %vm86, %v59, 0
  %v226 = vsel %vm86, %v60, 0
  %v229 = vsel %vm86, %v61, 0
  %v232 = vsel %vm86, %v62, 0
  %v235 = vsel %vm86, %v63, 0
  %v238 = vsel %vm86, %v64, 0
  %v241 = vsel %vm86, %v65, 0
  %v244 = vsel %vm86, %v66, 0
  %v247 = vsel %vm86, %v67, 0
  %v250 = vsel %vm86, %v68, 0
  %v253 = vsel %vm86, %v69, 0
  %v256 = vsel %vm86, %v70, 0
  %v259 = vsel %vm86, %v71, 0
  %v262 = vsel %vm86, %v72, 0
  %v265 = vsel %vm86, %v73, 0
  %v268 = vsel %vm86, %v74, 0
  %v271 = vsel %vm86, %v75, 0
  %v274 = vsel %vm86, %v76, 0
  %v277 = vsel %vm86, %v77, 0
  %vm279 = vcmask 1043456
  %v281 = vsel %vm279, %v78, 0
  %283 = vmatprep.subr.mxu0 0.0
  %284 = vmatpush1.msra.mxu0 0.0
  %285 = vmatprep.subr.mxu0 0.0
  %286 = vmatpush1.msra.mxu0 0.0
  %287 = vmatprep.subr.mxu0 0.0
  %288 = vmatpush1.msra.mxu0 0.0
  %289 = vmatprep.subr.mxu0 0.0
  %290 = vmatpush1.msra.mxu0 0.0
  %291 = vmatprep.subr.mxu0 0.0
  %292 = vmatpush1.msra.mxu0 0.0
  %293 = vmatprep.subr.mxu0 0.0
  %294 = vmatpush1.msra.mxu0 0.0
  %295 = vmatprep.subr.mxu0 0.0
  %296 = vmatpush1.msra.mxu0 0.0
  %297 = vmatprep.subr.mxu0 0.0
  %298 = vmatpush1.msra.mxu0 0.0
  %299 = vmatprep.subr.mxu0 0.0
  %300 = vmatpush1.msra.mxu0 0.0
  %301 = vmatprep.subr.mxu0 0.0
  %302 = vmatpush1.msra.mxu0 0.0
  %303 = vmatprep.subr.mxu0 0.0
  %304 = vmatpush1.msra.mxu0 0.0
  %305 = vmatprep.subr.mxu0 0.0
  %306 = vmatpush1.msra.mxu0 0.0
  %307 = vmatprep.subr.mxu0 0.0
  %308 = vmatpush1.msra.mxu0 0.0
  %309 = vmatprep.subr.mxu0 0.0
  %310 = vmatpush1.msra.mxu0 0.0
  %311 = vmatprep.subr.mxu0 0.0
  %312 = vmatpush1.msra.mxu0 0.0
  %313 = vmatprep.subr.mxu0 0.0
  %314 = vmatpush1.msra.mxu0 %v281
  %315 = vmatprep.subr.mxu0 0.0
  %316 = vmatpush2.msra.mxu0 0.0
  %317 = vmatprep.subr.mxu0 0.0
  %318 = vmatpush2.msra.mxu0 0.0
  %319 = vmatprep.subr.mxu0 0.0
  %320 = vmatpush2.msra.mxu0 0.0
  %321 = vmatprep.subr.mxu0 0.0
  %322 = vmatpush2.msra.mxu0 0.0
  %323 = vmatprep.subr.mxu0 0.0
  %324 = vmatpush2.msra.mxu0 0.0
  %325 = vmatprep.subr.mxu0 0.0
  %326 = vmatpush2.msra.mxu0 0.0
  %327 = vmatprep.subr.mxu0 0.0
  %328 = vmatpush2.msra.mxu0 0.0
  %329 = vmatprep.subr.mxu0 0.0
  %330 = vmatpush2.msra.mxu0 0.0
  %331 = vmatprep.subr.mxu0 0.0
  %332 = vmatpush2.msra.mxu0 0.0
  %333 = vmatprep.subr.mxu0 0.0
  %334 = vmatpush2.msra.mxu0 0.0
  %335 = vmatprep.subr.mxu0 0.0
  %336 = vmatpush2.msra.mxu0 0.0
  %337 = vmatprep.subr.mxu0 0.0
  %338 = vmatpush2.msra.mxu0 0.0
  %339 = vmatprep.subr.mxu0 0.0
  %340 = vmatpush2.msra.mxu0 0.0
  %341 = vmatprep.subr.mxu0 0.0
  %342 = vmatpush2.msra.mxu0 0.0
  %343 = vmatprep.subr.mxu0 0.0
  %344 = vmatpush2.msra.mxu0 0.0
  %345 = vmatprep.subr.mxu0 0.0
  %346 = vmatpush2.msra.mxu0 0.0
  %347 = vmatprep.mubr.f32.mxu0 0.0
  %348 = vmatmul.mubr.f32.gmra.mxu0 %v88
  %v349 = vpop.f32.mrf.mxu0
  %v350 = vadd.f32 %v84, %v349
  %v351 = vpop.f32.mrf.mxu0
  %352 = vmatprep.mubr.f32.mxu0 0.0
  %353 = vmatmul.mubr.f32.gmra.mxu0 %v91
  %v354 = vpop.f32.mrf.mxu0
  %v355 = vadd.f32 %v84, %v354
  %v356 = vpop.f32.mrf.mxu0
  %357 = vmatprep.mubr.f32.mxu0 0.0
  %358 = vmatmul.mubr.f32.gmra.mxu0 %v94
  %v359 = vpop.f32.mrf.mxu0
  %v360 = vadd.f32 %v84, %v359
  %v361 = vpop.f32.mrf.mxu0
  %362 = vmatprep.mubr.f32.mxu0 0.0
  %363 = vmatmul.mubr.f32.gmra.mxu0 %v97
  %v364 = vpop.f32.mrf.mxu0
  %v365 = vadd.f32 %v84, %v364
  %v366 = vpop.f32.mrf.mxu0
  %367 = vmatprep.mubr.f32.mxu0 0.0
  %368 = vmatmul.mubr.f32.gmra.mxu0 %v100
  %v369 = vpop.f32.mrf.mxu0
  %v370 = vadd.f32 %v84, %v369
  %v371 = vpop.f32.mrf.mxu0
  %372 = vmatprep.mubr.f32.mxu0 0.0
  %373 = vmatmul.mubr.f32.gmra.mxu0 %v103
  %v374 = vpop.f32.mrf.mxu0
  %v375 = vadd.f32 %v84, %v374
  %v376 = vpop.f32.mrf.mxu0
  %377 = vmatprep.mubr.f32.mxu0 0.0
  %378 = vmatmul.mubr.f32.gmra.mxu0 %v106
  %v379 = vpop.f32.mrf.mxu0
  %v380 = vadd.f32 %v84, %v379
  %v381 = vpop.f32.mrf.mxu0
  %382 = vmatprep.mubr.f32.mxu0 0.0
  %383 = vmatmul.mubr.f32.gmra.mxu0 %v109
  %v384 = vpop.f32.mrf.mxu0
  %v385 = vadd.f32 %v84, %v384
  %v386 = vpop.f32.mrf.mxu0
  %387 = vmatprep.mubr.f32.mxu0 0.0
  %388 = vmatmul.mubr.f32.gmra.mxu0 %v112
  %v389 = vpop.f32.mrf.mxu0
  %v390 = vadd.f32 %v84, %v389
  %v391 = vpop.f32.mrf.mxu0
  %392 = vmatprep.mubr.f32.mxu0 0.0
  %393 = vmatmul.mubr.f32.gmra.mxu0 %v115
  %v394 = vpop.f32.mrf.mxu0
  %v395 = vadd.f32 %v84, %v394
  %v396 = vpop.f32.mrf.mxu0
  %397 = vmatprep.mubr.f32.mxu0 0.0
  %398 = vmatmul.mubr.f32.gmra.mxu0 %v118
  %v399 = vpop.f32.mrf.mxu0
  %v400 = vadd.f32 %v84, %v399
  %v401 = vpop.f32.mrf.mxu0
  %402 = vmatprep.mubr.f32.mxu0 0.0
  %403 = vmatmul.mubr.f32.gmra.mxu0 %v121
  %v404 = vpop.f32.mrf.mxu0
  %v405 = vadd.f32 %v84, %v404
  %v406 = vpop.f32.mrf.mxu0
  %407 = vmatprep.mubr.f32.mxu0 0.0
  %408 = vmatmul.mubr.f32.gmra.mxu0 %v124
  %v409 = vpop.f32.mrf.mxu0
  %v410 = vadd.f32 %v84, %v409
  %v411 = vpop.f32.mrf.mxu0
  %412 = vmatprep.mubr.f32.mxu0 0.0
  %413 = vmatmul.mubr.f32.gmra.mxu0 %v127
  %v414 = vpop.f32.mrf.mxu0
  %v415 = vadd.f32 %v84, %v414
  %v416 = vpop.f32.mrf.mxu0
  %417 = vmatprep.mubr.f32.mxu0 0.0
  %418 = vmatmul.mubr.f32.gmra.mxu0 %v130
  %v419 = vpop.f32.mrf.mxu0
  %v420 = vadd.f32 %v84, %v419
  %v421 = vpop.f32.mrf.mxu0
  %422 = vmatprep.mubr.f32.mxu0 0.0
  %423 = vmatmul.mubr.f32.gmra.mxu0 %v133
  %v424 = vpop.f32.mrf.mxu0
  %v425 = vadd.f32 %v84, %v424
  %v426 = vpop.f32.mrf.mxu0
  %427 = vmatprep.mubr.f32.mxu0 0.0
  %428 = vmatmul.mubr.f32.gmra.mxu0 %v136
  %v429 = vpop.f32.mrf.mxu0
  %v430 = vadd.f32 %v84, %v429
  %v431 = vpop.f32.mrf.mxu0
  %432 = vmatprep.mubr.f32.mxu0 0.0
  %433 = vmatmul.mubr.f32.gmra.mxu0 %v139
  %v434 = vpop.f32.mrf.mxu0
  %v435 = vadd.f32 %v84, %v434
  %v436 = vpop.f32.mrf.mxu0
  %437 = vmatprep.mubr.f32.mxu0 0.0
  %438 = vmatmul.mubr.f32.gmra.mxu0 %v142
  %v439 = vpop.f32.mrf.mxu0
  %v440 = vadd.f32 %v84, %v439
  %v441 = vpop.f32.mrf.mxu0
  %442 = vmatprep.mubr.f32.mxu0 0.0
  %443 = vmatmul.mubr.f32.gmra.mxu0 %v145
  %v444 = vpop.f32.mrf.mxu0
  %v445 = vadd.f32 %v84, %v444
  %v446 = vpop.f32.mrf.mxu0
  %447 = vmatprep.mubr.f32.mxu0 0.0
  %448 = vmatmul.mubr.f32.gmra.mxu0 %v148
  %v449 = vpop.f32.mrf.mxu0
  %v450 = vadd.f32 %v84, %v449
  %v451 = vpop.f32.mrf.mxu0
  %452 = vmatprep.mubr.f32.mxu0 0.0
  %453 = vmatmul.mubr.f32.gmra.mxu0 %v151
  %v454 = vpop.f32.mrf.mxu0
  %v455 = vadd.f32 %v84, %v454
  %v456 = vpop.f32.mrf.mxu0
  %457 = vmatprep.mubr.f32.mxu0 0.0
  %458 = vmatmul.mubr.f32.gmra.mxu0 %v154
  %v459 = vpop.f32.mrf.mxu0
  %v460 = vadd.f32 %v84, %v459
  %v461 = vpop.f32.mrf.mxu0
  %462 = vmatprep.mubr.f32.mxu0 0.0
  %463 = vmatmul.mubr.f32.gmra.mxu0 %v157
  %v464 = vpop.f32.mrf.mxu0
  %v465 = vadd.f32 %v84, %v464
  %v466 = vpop.f32.mrf.mxu0
  %467 = vmatprep.mubr.f32.mxu0 0.0
  %468 = vmatmul.mubr.f32.gmra.mxu0 %v160
  %v469 = vpop.f32.mrf.mxu0
  %v470 = vadd.f32 %v84, %v469
  %v471 = vpop.f32.mrf.mxu0
  %472 = vmatprep.mubr.f32.mxu0 0.0
  %473 = vmatmul.mubr.f32.gmra.mxu0 %v163
  %v474 = vpop.f32.mrf.mxu0
  %v475 = vadd.f32 %v84, %v474
  %v476 = vpop.f32.mrf.mxu0
  %477 = vmatprep.mubr.f32.mxu0 0.0
  %478 = vmatmul.mubr.f32.gmra.mxu0 %v166
  %v479 = vpop.f32.mrf.mxu0
  %v480 = vadd.f32 %v84, %v479
  %v481 = vpop.f32.mrf.mxu0
  %482 = vmatprep.mubr.f32.mxu0 0.0
  %483 = vmatmul.mubr.f32.gmra.mxu0 %v169
  %v484 = vpop.f32.mrf.mxu0
  %v485 = vadd.f32 %v84, %v484
  %v486 = vpop.f32.mrf.mxu0
  %487 = vmatprep.mubr.f32.mxu0 0.0
  %488 = vmatmul.mubr.f32.gmra.mxu0 %v172
  %v489 = vpop.f32.mrf.mxu0
  %v490 = vadd.f32 %v84, %v489
  %v491 = vpop.f32.mrf.mxu0
  %492 = vmatprep.mubr.f32.mxu0 0.0
  %493 = vmatmul.mubr.f32.gmra.mxu0 %v175
  %v494 = vpop.f32.mrf.mxu0
  %v495 = vadd.f32 %v84, %v494
  %v496 = vpop.f32.mrf.mxu0
  %497 = vmatprep.mubr.f32.mxu0 0.0
  %498 = vmatmul.mubr.f32.gmra.mxu0 %v178
  %v499 = vpop.f32.mrf.mxu0
  %v500 = vadd.f32 %v84, %v499
  %v501 = vpop.f32.mrf.mxu0
  %502 = vmatprep.mubr.f32.mxu0 0.0
  %503 = vmatmul.mubr.f32.gmra.mxu0 %v181
  %v504 = vpop.f32.mrf.mxu0
  %v505 = vadd.f32 %v84, %v504
  %v506 = vpop.f32.mrf.mxu0
  %507 = vmatprep.mubr.f32.mxu0 0.0
  %508 = vmatmul.mubr.f32.gmra.mxu0 %v184
  %v509 = vpop.f32.mrf.mxu0
  %v510 = vadd.f32 %v84, %v509
  %v511 = vpop.f32.mrf.mxu0
  %512 = vmatprep.mubr.f32.mxu0 0.0
  %513 = vmatmul.mubr.f32.gmra.mxu0 %v187
  %v514 = vpop.f32.mrf.mxu0
  %v515 = vadd.f32 %v84, %v514
  %v516 = vpop.f32.mrf.mxu0
  %517 = vmatprep.mubr.f32.mxu0 0.0
  %518 = vmatmul.mubr.f32.gmra.mxu0 %v190
  %v519 = vpop.f32.mrf.mxu0
  %v520 = vadd.f32 %v84, %v519
  %v521 = vpop.f32.mrf.mxu0
  %522 = vmatprep.mubr.f32.mxu0 0.0
  %523 = vmatmul.mubr.f32.gmra.mxu0 %v193
  %v524 = vpop.f32.mrf.mxu0
  %v525 = vadd.f32 %v84, %v524
  %v526 = vpop.f32.mrf.mxu0
  %527 = vmatprep.mubr.f32.mxu0 0.0
  %528 = vmatmul.mubr.f32.gmra.mxu0 %v196
  %v529 = vpop.f32.mrf.mxu0
  %v530 = vadd.f32 %v84, %v529
  %v531 = vpop.f32.mrf.mxu0
  %532 = vmatprep.mubr.f32.mxu0 0.0
  %533 = vmatmul.mubr.f32.gmra.mxu0 %v199
  %v534 = vpop.f32.mrf.mxu0
  %v535 = vadd.f32 %v84, %v534
  %v536 = vpop.f32.mrf.mxu0
  %537 = vmatprep.mubr.f32.mxu0 0.0
  %538 = vmatmul.mubr.f32.gmra.mxu0 %v202
  %v539 = vpop.f32.mrf.mxu0
  %v540 = vadd.f32 %v84, %v539
  %v541 = vpop.f32.mrf.mxu0
  %542 = vmatprep.mubr.f32.mxu0 0.0
  %543 = vmatmul.mubr.f32.gmra.mxu0 %v205
  %v544 = vpop.f32.mrf.mxu0
  %v545 = vadd.f32 %v84, %v544
  %v546 = vpop.f32.mrf.mxu0
  %547 = vmatprep.mubr.f32.mxu0 0.0
  %548 = vmatmul.mubr.f32.gmra.mxu0 %v208
  %v549 = vpop.f32.mrf.mxu0
  %v550 = vadd.f32 %v84, %v549
  %v551 = vpop.f32.mrf.mxu0
  %552 = vmatprep.mubr.f32.mxu0 0.0
  %553 = vmatmul.mubr.f32.gmra.mxu0 %v211
  %v554 = vpop.f32.mrf.mxu0
  %v555 = vadd.f32 %v84, %v554
  %v556 = vpop.f32.mrf.mxu0
  %557 = vmatprep.mubr.f32.mxu0 0.0
  %558 = vmatmul.mubr.f32.gmra.mxu0 %v214
  %v559 = vpop.f32.mrf.mxu0
  %v560 = vadd.f32 %v84, %v559
  %v561 = vpop.f32.mrf.mxu0
  %562 = vmatprep.mubr.f32.mxu0 0.0
  %563 = vmatmul.mubr.f32.gmra.mxu0 %v217
  %v564 = vpop.f32.mrf.mxu0
  %v565 = vadd.f32 %v84, %v564
  %v566 = vpop.f32.mrf.mxu0
  %567 = vmatprep.mubr.f32.mxu0 0.0
  %568 = vmatmul.mubr.f32.gmra.mxu0 %v220
  %v569 = vpop.f32.mrf.mxu0
  %v570 = vadd.f32 %v84, %v569
  %v571 = vpop.f32.mrf.mxu0
  %572 = vmatprep.mubr.f32.mxu0 0.0
  %573 = vmatmul.mubr.f32.gmra.mxu0 %v223
  %v574 = vpop.f32.mrf.mxu0
  %v575 = vadd.f32 %v84, %v574
  %v576 = vpop.f32.mrf.mxu0
  %577 = vmatprep.mubr.f32.mxu0 0.0
  %578 = vmatmul.mubr.f32.gmra.mxu0 %v226
  %v579 = vpop.f32.mrf.mxu0
  %v580 = vadd.f32 %v84, %v579
  %v581 = vpop.f32.mrf.mxu0
  %582 = vmatprep.mubr.f32.mxu0 0.0
  %583 = vmatmul.mubr.f32.gmra.mxu0 %v229
  %v584 = vpop.f32.mrf.mxu0
  %v585 = vadd.f32 %v84, %v584
  %v586 = vpop.f32.mrf.mxu0
  %587 = vmatprep.mubr.f32.mxu0 0.0
  %588 = vmatmul.mubr.f32.gmra.mxu0 %v232
  %v589 = vpop.f32.mrf.mxu0
  %v590 = vadd.f32 %v84, %v589
  %v591 = vpop.f32.mrf.mxu0
  %592 = vmatprep.mubr.f32.mxu0 0.0
  %593 = vmatmul.mubr.f32.gmra.mxu0 %v235
  %v594 = vpop.f32.mrf.mxu0
  %v595 = vadd.f32 %v84, %v594
  %v596 = vpop.f32.mrf.mxu0
  %597 = vmatprep.mubr.f32.mxu0 0.0
  %598 = vmatmul.mubr.f32.gmra.mxu0 %v238
  %v599 = vpop.f32.mrf.mxu0
  %v600 = vadd.f32 %v84, %v599
  %v601 = vpop.f32.mrf.mxu0
  %602 = vmatprep.mubr.f32.mxu0 0.0
  %603 = vmatmul.mubr.f32.gmra.mxu0 %v241
  %v604 = vpop.f32.mrf.mxu0
  %v605 = vadd.f32 %v84, %v604
  %v606 = vpop.f32.mrf.mxu0
  %607 = vmatprep.mubr.f32.mxu0 0.0
  %608 = vmatmul.mubr.f32.gmra.mxu0 %v244
  %v609 = vpop.f32.mrf.mxu0
  %v610 = vadd.f32 %v84, %v609
  %v611 = vpop.f32.mrf.mxu0
  %612 = vmatprep.mubr.f32.mxu0 0.0
  %613 = vmatmul.mubr.f32.gmra.mxu0 %v247
  %v614 = vpop.f32.mrf.mxu0
  %v615 = vadd.f32 %v84, %v614
  %v616 = vpop.f32.mrf.mxu0
  %617 = vmatprep.mubr.f32.mxu0 0.0
  %618 = vmatmul.mubr.f32.gmra.mxu0 %v250
  %v619 = vpop.f32.mrf.mxu0
  %v620 = vadd.f32 %v84, %v619
  %v621 = vpop.f32.mrf.mxu0
  %622 = vmatprep.mubr.f32.mxu0 0.0
  %623 = vmatmul.mubr.f32.gmra.mxu0 %v253
  %v624 = vpop.f32.mrf.mxu0
  %v625 = vadd.f32 %v84, %v624
  %v626 = vpop.f32.mrf.mxu0
  %627 = vmatprep.mubr.f32.mxu0 0.0
  %628 = vmatmul.mubr.f32.gmra.mxu0 %v256
  %v629 = vpop.f32.mrf.mxu0
  %v630 = vadd.f32 %v84, %v629
  %v631 = vpop.f32.mrf.mxu0
  %632 = vmatprep.mubr.f32.mxu0 0.0
  %633 = vmatmul.mubr.f32.gmra.mxu0 %v259
  %v634 = vpop.f32.mrf.mxu0
  %v635 = vadd.f32 %v84, %v634
  %v636 = vpop.f32.mrf.mxu0
  %637 = vmatprep.mubr.f32.mxu0 0.0
  %638 = vmatmul.mubr.f32.gmra.mxu0 %v262
  %v639 = vpop.f32.mrf.mxu0
  %v640 = vadd.f32 %v84, %v639
  %v641 = vpop.f32.mrf.mxu0
  %642 = vmatprep.mubr.f32.mxu0 0.0
  %643 = vmatmul.mubr.f32.gmra.mxu0 %v265
  %v644 = vpop.f32.mrf.mxu0
  %v645 = vadd.f32 %v84, %v644
  %v646 = vpop.f32.mrf.mxu0
  %647 = vmatprep.mubr.f32.mxu0 0.0
  %648 = vmatmul.mubr.f32.gmra.mxu0 %v268
  %v649 = vpop.f32.mrf.mxu0
  %v650 = vadd.f32 %v84, %v649
  %v651 = vpop.f32.mrf.mxu0
  %652 = vmatprep.mubr.f32.mxu0 0.0
  %653 = vmatmul.mubr.f32.gmra.mxu0 %v271
  %v654 = vpop.f32.mrf.mxu0
  %v655 = vadd.f32 %v84, %v654
  %v656 = vpop.f32.mrf.mxu0
  %657 = vmatprep.mubr.f32.mxu0 0.0
  %658 = vmatmul.mubr.f32.gmra.mxu0 %v274
  %v659 = vpop.f32.mrf.mxu0
  %v660 = vadd.f32 %v84, %v659
  %v661 = vpop.f32.mrf.mxu0
  %662 = vmatprep.mubr.f32.mxu0 0.0
  %663 = vmatmul.mubr.f32.gmra.mxu0 %v277
  %v664 = vpop.f32.mrf.mxu0
  %v665 = vadd.f32 %v84, %v664
  %v666 = vpop.f32.mrf.mxu0
  %667 = vdwg.mxu0
  %vm668 = vcmask 130048
  %669 = vst.msk [vmem:[%s3] sm:$0xff] %vm668, %v350
  %670 = vst.msk [vmem:[%s3 + $0x8] sm:$0xff] %vm668, %v355
  %673 = vrot.lane.b32.xlu0 %v350, 112
  %v674 = vpop.permute.xlu0 %673
  %675 = vrot.lane.b32.xlu0 %v355, 112
  %v676 = vpop.permute.xlu0 %675
  %679 = vst.msk [vmem:[%s3 + $0x10] sm:$0xff] %vm668, %v674
  %680 = vst.msk [vmem:[%s3 + $0x18] sm:$0xff] %vm668, %v676
  %s681 = scalar_lea.vmem %s3, 32
  %682 = vst.msk [vmem:[%s681] sm:$0xff] %vm668, %v360
  %683 = vst.msk [vmem:[%s681 + $0x8] sm:$0xff] %vm668, %v365
  %686 = vrot.lane.b32.xlu0 %v360, 112
  %v687 = vpop.permute.xlu0 %686
  %688 = vrot.lane.b32.xlu0 %v365, 112
  %v689 = vpop.permute.xlu0 %688
  %692 = vst.msk [vmem:[%s681 + $0x10] sm:$0xff] %vm668, %v687
  %693 = vst.msk [vmem:[%s681 + $0x18] sm:$0xff] %vm668, %v689
  %s694 = scalar_lea.vmem %s3, 64
  %695 = vst.msk [vmem:[%s694] sm:$0xff] %vm668, %v370
  %696 = vst.msk [vmem:[%s694 + $0x8] sm:$0xff] %vm668, %v375
  %699 = vrot.lane.b32.xlu0 %v370, 112
  %v700 = vpop.permute.xlu0 %699
  %701 = vrot.lane.b32.xlu0 %v375, 112
  %v702 = vpop.permute.xlu0 %701
  %705 = vst.msk [vmem:[%s694 + $0x10] sm:$0xff] %vm668, %v700
  %706 = vst.msk [vmem:[%s694 + $0x18] sm:$0xff] %vm668, %v702
  %s707 = scalar_lea.vmem %s3, 96
  %708 = vst.msk [vmem:[%s707] sm:$0xff] %vm668, %v380
  %709 = vst.msk [vmem:[%s707 + $0x8] sm:$0xff] %vm668, %v385
  %712 = vrot.lane.b32.xlu0 %v380, 112
  %v713 = vpop.permute.xlu0 %712
  %714 = vrot.lane.b32.xlu0 %v385, 112
  %v715 = vpop.permute.xlu0 %714
  %718 = vst.msk [vmem:[%s707 + $0x10] sm:$0xff] %vm668, %v713
  %719 = vst.msk [vmem:[%s707 + $0x18] sm:$0xff] %vm668, %v715
  %s720 = scalar_lea.vmem %s3, 128
  %721 = vst.msk [vmem:[%s720] sm:$0xff] %vm668, %v390
  %722 = vst.msk [vmem:[%s720 + $0x8] sm:$0xff] %vm668, %v395
  %725 = vrot.lane.b32.xlu0 %v390, 112
  %v726 = vpop.permute.xlu0 %725
  %727 = vrot.lane.b32.xlu0 %v395, 112
  %v728 = vpop.permute.xlu0 %727
  %731 = vst.msk [vmem:[%s720 + $0x10] sm:$0xff] %vm668, %v726
  %732 = vst.msk [vmem:[%s720 + $0x18] sm:$0xff] %vm668, %v728
  %s733 = scalar_lea.vmem %s3, 160
  %734 = vst.msk [vmem:[%s733] sm:$0xff] %vm668, %v400
  %735 = vst.msk [vmem:[%s733 + $0x8] sm:$0xff] %vm668, %v405
  %738 = vrot.lane.b32.xlu0 %v400, 112
  %v739 = vpop.permute.xlu0 %738
  %740 = vrot.lane.b32.xlu0 %v405, 112
  %v741 = vpop.permute.xlu0 %740
  %744 = vst.msk [vmem:[%s733 + $0x10] sm:$0xff] %vm668, %v739
  %745 = vst.msk [vmem:[%s733 + $0x18] sm:$0xff] %vm668, %v741
  %s746 = scalar_lea.vmem %s3, 192
  %747 = vst.msk [vmem:[%s746] sm:$0xff] %vm668, %v410
  %748 = vst.msk [vmem:[%s746 + $0x8] sm:$0xff] %vm668, %v415
  %751 = vrot.lane.b32.xlu0 %v410, 112
  %v752 = vpop.permute.xlu0 %751
  %753 = vrot.lane.b32.xlu0 %v415, 112
  %v754 = vpop.permute.xlu0 %753
  %757 = vst.msk [vmem:[%s746 + $0x10] sm:$0xff] %vm668, %v752
  %758 = vst.msk [vmem:[%s746 + $0x18] sm:$0xff] %vm668, %v754
  %s759 = scalar_lea.vmem %s3, 224
  %760 = vst.msk [vmem:[%s759] sm:$0xff] %vm668, %v420
  %761 = vst.msk [vmem:[%s759 + $0x8] sm:$0xff] %vm668, %v425
  %764 = vrot.lane.b32.xlu0 %v420, 112
  %v765 = vpop.permute.xlu0 %764
  %766 = vrot.lane.b32.xlu0 %v425, 112
  %v767 = vpop.permute.xlu0 %766
  %770 = vst.msk [vmem:[%s759 + $0x10] sm:$0xff] %vm668, %v765
  %771 = vst.msk [vmem:[%s759 + $0x18] sm:$0xff] %vm668, %v767
  %s772 = scalar_lea.vmem %s3, 256
  %773 = vst.msk [vmem:[%s772] sm:$0xff] %vm668, %v430
  %774 = vst.msk [vmem:[%s772 + $0x8] sm:$0xff] %vm668, %v435
  %777 = vrot.lane.b32.xlu0 %v430, 112
  %v778 = vpop.permute.xlu0 %777
  %779 = vrot.lane.b32.xlu0 %v435, 112
  %v780 = vpop.permute.xlu0 %779
  %783 = vst.msk [vmem:[%s772 + $0x10] sm:$0xff] %vm668, %v778
  %784 = vst.msk [vmem:[%s772 + $0x18] sm:$0xff] %vm668, %v780
  %s785 = scalar_lea.vmem %s3, 288
  %786 = vst.msk [vmem:[%s785] sm:$0xff] %vm668, %v440
  %787 = vst.msk [vmem:[%s785 + $0x8] sm:$0xff] %vm668, %v445
  %790 = vrot.lane.b32.xlu0 %v440, 112
  %v791 = vpop.permute.xlu0 %790
  %792 = vrot.lane.b32.xlu0 %v445, 112
  %v793 = vpop.permute.xlu0 %792
  %796 = vst.msk [vmem:[%s785 + $0x10] sm:$0xff] %vm668, %v791
  %797 = vst.msk [vmem:[%s785 + $0x18] sm:$0xff] %vm668, %v793
  %s798 = scalar_lea.vmem %s3, 320
  %799 = vst.msk [vmem:[%s798] sm:$0xff] %vm668, %v450
  %800 = vst.msk [vmem:[%s798 + $0x8] sm:$0xff] %vm668, %v455
  %803 = vrot.lane.b32.xlu0 %v450, 112
  %v804 = vpop.permute.xlu0 %803
  %805 = vrot.lane.b32.xlu0 %v455, 112
  %v806 = vpop.permute.xlu0 %805
  %809 = vst.msk [vmem:[%s798 + $0x10] sm:$0xff] %vm668, %v804
  %810 = vst.msk [vmem:[%s798 + $0x18] sm:$0xff] %vm668, %v806
  %s811 = scalar_lea.vmem %s3, 352
  %812 = vst.msk [vmem:[%s811] sm:$0xff] %vm668, %v460
  %813 = vst.msk [vmem:[%s811 + $0x8] sm:$0xff] %vm668, %v465
  %816 = vrot.lane.b32.xlu0 %v460, 112
  %v817 = vpop.permute.xlu0 %816
  %818 = vrot.lane.b32.xlu0 %v465, 112
  %v819 = vpop.permute.xlu0 %818
  %822 = vst.msk [vmem:[%s811 + $0x10] sm:$0xff] %vm668, %v817
  %823 = vst.msk [vmem:[%s811 + $0x18] sm:$0xff] %vm668, %v819
  %s824 = scalar_lea.vmem %s3, 384
  %825 = vst.msk [vmem:[%s824] sm:$0xff] %vm668, %v470
  %826 = vst.msk [vmem:[%s824 + $0x8] sm:$0xff] %vm668, %v475
  %829 = vrot.lane.b32.xlu0 %v470, 112
  %v830 = vpop.permute.xlu0 %829
  %831 = vrot.lane.b32.xlu0 %v475, 112
  %v832 = vpop.permute.xlu0 %831
  %835 = vst.msk [vmem:[%s824 + $0x10] sm:$0xff] %vm668, %v830
  %836 = vst.msk [vmem:[%s824 + $0x18] sm:$0xff] %vm668, %v832
  %s837 = scalar_lea.vmem %s3, 416
  %838 = vst.msk [vmem:[%s837] sm:$0xff] %vm668, %v480
  %839 = vst.msk [vmem:[%s837 + $0x8] sm:$0xff] %vm668, %v485
  %842 = vrot.lane.b32.xlu0 %v480, 112
  %v843 = vpop.permute.xlu0 %842
  %844 = vrot.lane.b32.xlu0 %v485, 112
  %v845 = vpop.permute.xlu0 %844
  %848 = vst.msk [vmem:[%s837 + $0x10] sm:$0xff] %vm668, %v843
  %849 = vst.msk [vmem:[%s837 + $0x18] sm:$0xff] %vm668, %v845
  %s850 = scalar_lea.vmem %s3, 448
  %851 = vst.msk [vmem:[%s850] sm:$0xff] %vm668, %v490
  %852 = vst.msk [vmem:[%s850 + $0x8] sm:$0xff] %vm668, %v495
  %855 = vrot.lane.b32.xlu0 %v490, 112
  %v856 = vpop.permute.xlu0 %855
  %857 = vrot.lane.b32.xlu0 %v495, 112
  %v858 = vpop.permute.xlu0 %857
  %861 = vst.msk [vmem:[%s850 + $0x10] sm:$0xff] %vm668, %v856
  %862 = vst.msk [vmem:[%s850 + $0x18] sm:$0xff] %vm668, %v858
  %s863 = scalar_lea.vmem %s3, 480
  %864 = vst.msk [vmem:[%s863] sm:$0xff] %vm668, %v500
  %865 = vst.msk [vmem:[%s863 + $0x8] sm:$0xff] %vm668, %v505
  %868 = vrot.lane.b32.xlu0 %v500, 112
  %v869 = vpop.permute.xlu0 %868
  %870 = vrot.lane.b32.xlu0 %v505, 112
  %v871 = vpop.permute.xlu0 %870
  %874 = vst.msk [vmem:[%s863 + $0x10] sm:$0xff] %vm668, %v869
  %875 = vst.msk [vmem:[%s863 + $0x18] sm:$0xff] %vm668, %v871
  %s876 = scalar_lea.vmem %s3, 512
  %877 = vst.msk [vmem:[%s876] sm:$0xff] %vm668, %v510
  %878 = vst.msk [vmem:[%s876 + $0x8] sm:$0xff] %vm668, %v515
  %881 = vrot.lane.b32.xlu0 %v510, 112
  %v882 = vpop.permute.xlu0 %881
  %883 = vrot.lane.b32.xlu0 %v515, 112
  %v884 = vpop.permute.xlu0 %883
  %887 = vst.msk [vmem:[%s876 + $0x10] sm:$0xff] %vm668, %v882
  %888 = vst.msk [vmem:[%s876 + $0x18] sm:$0xff] %vm668, %v884
  %s889 = scalar_lea.vmem %s3, 544
  %890 = vst.msk [vmem:[%s889] sm:$0xff] %vm668, %v520
  %891 = vst.msk [vmem:[%s889 + $0x8] sm:$0xff] %vm668, %v525
  %894 = vrot.lane.b32.xlu0 %v520, 112
  %v895 = vpop.permute.xlu0 %894
  %896 = vrot.lane.b32.xlu0 %v525, 112
  %v897 = vpop.permute.xlu0 %896
  %900 = vst.msk [vmem:[%s889 + $0x10] sm:$0xff] %vm668, %v895
  %901 = vst.msk [vmem:[%s889 + $0x18] sm:$0xff] %vm668, %v897
  %s902 = scalar_lea.vmem %s3, 576
  %903 = vst.msk [vmem:[%s902] sm:$0xff] %vm668, %v530
  %904 = vst.msk [vmem:[%s902 + $0x8] sm:$0xff] %vm668, %v535
  %907 = vrot.lane.b32.xlu0 %v530, 112
  %v908 = vpop.permute.xlu0 %907
  %909 = vrot.lane.b32.xlu0 %v535, 112
  %v910 = vpop.permute.xlu0 %909
  %913 = vst.msk [vmem:[%s902 + $0x10] sm:$0xff] %vm668, %v908
  %914 = vst.msk [vmem:[%s902 + $0x18] sm:$0xff] %vm668, %v910
  %s915 = scalar_lea.vmem %s3, 608
  %916 = vst.msk [vmem:[%s915] sm:$0xff] %vm668, %v540
  %917 = vst.msk [vmem:[%s915 + $0x8] sm:$0xff] %vm668, %v545
  %920 = vrot.lane.b32.xlu0 %v540, 112
  %v921 = vpop.permute.xlu0 %920
  %922 = vrot.lane.b32.xlu0 %v545, 112
  %v923 = vpop.permute.xlu0 %922
  %926 = vst.msk [vmem:[%s915 + $0x10] sm:$0xff] %vm668, %v921
  %927 = vst.msk [vmem:[%s915 + $0x18] sm:$0xff] %vm668, %v923
  %s928 = scalar_lea.vmem %s3, 640
  %929 = vst.msk [vmem:[%s928] sm:$0xff] %vm668, %v550
  %930 = vst.msk [vmem:[%s928 + $0x8] sm:$0xff] %vm668, %v555
  %933 = vrot.lane.b32.xlu0 %v550, 112
  %v934 = vpop.permute.xlu0 %933
  %935 = vrot.lane.b32.xlu0 %v555, 112
  %v936 = vpop.permute.xlu0 %935
  %939 = vst.msk [vmem:[%s928 + $0x10] sm:$0xff] %vm668, %v934
  %940 = vst.msk [vmem:[%s928 + $0x18] sm:$0xff] %vm668, %v936
  %s941 = scalar_lea.vmem %s3, 672
  %942 = vst.msk [vmem:[%s941] sm:$0xff] %vm668, %v560
  %943 = vst.msk [vmem:[%s941 + $0x8] sm:$0xff] %vm668, %v565
  %946 = vrot.lane.b32.xlu0 %v560, 112
  %v947 = vpop.permute.xlu0 %946
  %948 = vrot.lane.b32.xlu0 %v565, 112
  %v949 = vpop.permute.xlu0 %948
  %952 = vst.msk [vmem:[%s941 + $0x10] sm:$0xff] %vm668, %v947
  %953 = vst.msk [vmem:[%s941 + $0x18] sm:$0xff] %vm668, %v949
  %s954 = scalar_lea.vmem %s3, 704
  %955 = vst.msk [vmem:[%s954] sm:$0xff] %vm668, %v570
  %956 = vst.msk [vmem:[%s954 + $0x8] sm:$0xff] %vm668, %v575
  %959 = vrot.lane.b32.xlu0 %v570, 112
  %v960 = vpop.permute.xlu0 %959
  %961 = vrot.lane.b32.xlu0 %v575, 112
  %v962 = vpop.permute.xlu0 %961
  %965 = vst.msk [vmem:[%s954 + $0x10] sm:$0xff] %vm668, %v960
  %966 = vst.msk [vmem:[%s954 + $0x18] sm:$0xff] %vm668, %v962
  %s967 = scalar_lea.vmem %s3, 736
  %968 = vst.msk [vmem:[%s967] sm:$0xff] %vm668, %v580
  %969 = vst.msk [vmem:[%s967 + $0x8] sm:$0xff] %vm668, %v585
  %972 = vrot.lane.b32.xlu0 %v580, 112
  %v973 = vpop.permute.xlu0 %972
  %974 = vrot.lane.b32.xlu0 %v585, 112
  %v975 = vpop.permute.xlu0 %974
  %978 = vst.msk [vmem:[%s967 + $0x10] sm:$0xff] %vm668, %v973
  %979 = vst.msk [vmem:[%s967 + $0x18] sm:$0xff] %vm668, %v975
  %s980 = scalar_lea.vmem %s3, 768
  %981 = vst.msk [vmem:[%s980] sm:$0xff] %vm668, %v590
  %982 = vst.msk [vmem:[%s980 + $0x8] sm:$0xff] %vm668, %v595
  %985 = vrot.lane.b32.xlu0 %v590, 112
  %v986 = vpop.permute.xlu0 %985
  %987 = vrot.lane.b32.xlu0 %v595, 112
  %v988 = vpop.permute.xlu0 %987
  %991 = vst.msk [vmem:[%s980 + $0x10] sm:$0xff] %vm668, %v986
  %992 = vst.msk [vmem:[%s980 + $0x18] sm:$0xff] %vm668, %v988
  %s993 = scalar_lea.vmem %s3, 800
  %994 = vst.msk [vmem:[%s993] sm:$0xff] %vm668, %v600
  %995 = vst.msk [vmem:[%s993 + $0x8] sm:$0xff] %vm668, %v605
  %998 = vrot.lane.b32.xlu0 %v600, 112
  %v999 = vpop.permute.xlu0 %998
  %1000 = vrot.lane.b32.xlu0 %v605, 112
  %v1001 = vpop.permute.xlu0 %1000
  %1004 = vst.msk [vmem:[%s993 + $0x10] sm:$0xff] %vm668, %v999
  %1005 = vst.msk [vmem:[%s993 + $0x18] sm:$0xff] %vm668, %v1001
  %s1006 = scalar_lea.vmem %s3, 832
  %1007 = vst.msk [vmem:[%s1006] sm:$0xff] %vm668, %v610
  %1008 = vst.msk [vmem:[%s1006 + $0x8] sm:$0xff] %vm668, %v615
  %1011 = vrot.lane.b32.xlu0 %v610, 112
  %v1012 = vpop.permute.xlu0 %1011
  %1013 = vrot.lane.b32.xlu0 %v615, 112
  %v1014 = vpop.permute.xlu0 %1013
  %1017 = vst.msk [vmem:[%s1006 + $0x10] sm:$0xff] %vm668, %v1012
  %1018 = vst.msk [vmem:[%s1006 + $0x18] sm:$0xff] %vm668, %v1014
  %s1019 = scalar_lea.vmem %s3, 864
  %1020 = vst.msk [vmem:[%s1019] sm:$0xff] %vm668, %v620
  %1021 = vst.msk [vmem:[%s1019 + $0x8] sm:$0xff] %vm668, %v625
  %1024 = vrot.lane.b32.xlu0 %v620, 112
  %v1025 = vpop.permute.xlu0 %1024
  %1026 = vrot.lane.b32.xlu0 %v625, 112
  %v1027 = vpop.permute.xlu0 %1026
  %1030 = vst.msk [vmem:[%s1019 + $0x10] sm:$0xff] %vm668, %v1025
  %1031 = vst.msk [vmem:[%s1019 + $0x18] sm:$0xff] %vm668, %v1027
  %s1032 = scalar_lea.vmem %s3, 896
  %1033 = vst.msk [vmem:[%s1032] sm:$0xff] %vm668, %v630
  %1034 = vst.msk [vmem:[%s1032 + $0x8] sm:$0xff] %vm668, %v635
  %1037 = vrot.lane.b32.xlu0 %v630, 112
  %v1038 = vpop.permute.xlu0 %1037
  %1039 = vrot.lane.b32.xlu0 %v635, 112
  %v1040 = vpop.permute.xlu0 %1039
  %1043 = vst.msk [vmem:[%s1032 + $0x10] sm:$0xff] %vm668, %v1038
  %1044 = vst.msk [vmem:[%s1032 + $0x18] sm:$0xff] %vm668, %v1040
  %s1045 = scalar_lea.vmem %s3, 928
  %1046 = vst.msk [vmem:[%s1045] sm:$0xff] %vm668, %v640
  %1047 = vst.msk [vmem:[%s1045 + $0x8] sm:$0xff] %vm668, %v645
  %1050 = vrot.lane.b32.xlu0 %v640, 112
  %v1051 = vpop.permute.xlu0 %1050
  %1052 = vrot.lane.b32.xlu0 %v645, 112
  %v1053 = vpop.permute.xlu0 %1052
  %1056 = vst.msk [vmem:[%s1045 + $0x10] sm:$0xff] %vm668, %v1051
  %1057 = vst.msk [vmem:[%s1045 + $0x18] sm:$0xff] %vm668, %v1053
  %s1058 = scalar_lea.vmem %s3, 960
  %1059 = vst.msk [vmem:[%s1058] sm:$0xff] %vm668, %v650
  %1060 = vst.msk [vmem:[%s1058 + $0x8] sm:$0xff] %vm668, %v655
  %1063 = vrot.lane.b32.xlu0 %v650, 112
  %v1064 = vpop.permute.xlu0 %1063
  %1065 = vrot.lane.b32.xlu0 %v655, 112
  %v1066 = vpop.permute.xlu0 %1065
  %1069 = vst.msk [vmem:[%s1058 + $0x10] sm:$0xff] %vm668, %v1064
  %1070 = vst.msk [vmem:[%s1058 + $0x18] sm:$0xff] %vm668, %v1066
  %s1071 = scalar_lea.vmem %s3, 992
  %1072 = vst.msk [vmem:[%s1071] sm:$0xff] %vm668, %v660
  %1073 = vst.msk [vmem:[%s1071 + $0x8] sm:$0xff] %vm668, %v665
  %1076 = vrot.lane.b32.xlu0 %v660, 112
  %v1077 = vpop.permute.xlu0 %1076
  %1078 = vrot.lane.b32.xlu0 %v665, 112
  %v1079 = vpop.permute.xlu0 %1078
  %1082 = vst.msk [vmem:[%s1071 + $0x10] sm:$0xff] %vm668, %v1077
  %1083 = vst.msk [vmem:[%s1071 + $0x18] sm:$0xff] %vm668, %v1079
  // Predicated region
  $region14: #{upsample_conv_transpose2d.1} parent=0 // pred_check
    _
  $region15: #{upsample_conv_transpose2d.1} parent=0 // pred_check_branch
    %1085 = sbr.rel (0) target = $region17
  $region16: #{upsample_conv_transpose2d.1} parent=0 // pred_region
    _
  $region17: #{upsample_conv_transpose2d.1} parent=0 // pred_fallthru
    _
  // Predicated region
  $region18: #{upsample_conv_transpose2d.1} parent=0 // pred_check
    _
  $region19: #{upsample_conv_transpose2d.1} parent=0 // pred_check_branch
    %1087 = sbr.rel (0) target = $region21
  $region20: #{upsample_conv_transpose2d.1} parent=0 // pred_region
    _
  $region21: #{upsample_conv_transpose2d.1} parent=0 // pred_fallthru
    _

</llo_original>
